<compile_context>
chip_gen: v5e
topology: v5e:2x2
jax: 0.10.0
libtpu: 0.0.40
codegen_flags: <defaults>
</compile_context>

<pallas_src>
import jax
import jax.numpy as jnp
from jax.experimental import pallas as pl
from jax.experimental.pallas import tpu as pltpu

_LANE = 128
_SUBLANE = 8

_WEIGHT_KEYS = ("w1", "b1", "w2a", "b2a", "w2b", "b2b",
                "w3a", "b3a", "w3b", "b3b", "w4", "b4")


def _round_up(v, m):
    return (v + m - 1) // m * m


def _linear_shortcut_kernel(
    x_ref,
    w1_ref, b1_ref,
    w2a_ref, b2a_ref, w2b_ref, b2b_ref,
    w3a_ref, b3a_ref, w3b_ref, b3b_ref,
    w4_ref, b4_ref,
    o_ref,
):
    """Fused forward of LinearwithShortcut for one batch tile.

    x = linear1(x)
    x = x + linear2(x)   # ReLU -> Linear(h,h) -> ReLU -> Linear(h,h)
    x = x + linear3(x)   # ReLU -> Linear(h,h) -> ReLU -> Linear(h,h)
    y = sigmoid(ReLU -> Linear(h,out))

    MXU operands are bf16; accumulation and all elementwise math are f32.
    """
    x = x_ref[...]
    if x.dtype != jnp.bfloat16:
        x = x.astype(jnp.bfloat16)

    # linear1
    h = jnp.dot(x, w1_ref[...], preferred_element_type=jnp.float32) + b1_ref[...]

    def residual_block(h, wa_ref, ba_ref, wb_ref, bb_ref):
        t = jnp.maximum(h, 0.0).astype(jnp.bfloat16)                               # ReLU (f32) -> bf16
        t = jnp.dot(t, wa_ref[...], preferred_element_type=jnp.float32) + ba_ref[...]
        t = jnp.maximum(t, 0.0).astype(jnp.bfloat16)                               # ReLU (f32) -> bf16
        t = jnp.dot(t, wb_ref[...], preferred_element_type=jnp.float32) + bb_ref[...]
        return h + t                                                               # shortcut add (f32)

    h = residual_block(h, w2a_ref, b2a_ref, w2b_ref, b2b_ref)   # x = x + linear2(x)
    h = residual_block(h, w3a_ref, b3a_ref, w3b_ref, b3b_ref)   # x = x + linear3(x)

    # linear4: ReLU -> Linear(hidden, out), then Sigmoid
    t = jnp.maximum(h, 0.0).astype(jnp.bfloat16)
    y = jnp.dot(t, w4_ref[...], preferred_element_type=jnp.float32) + b4_ref[...]
    o_ref[...] = jax.nn.sigmoid(y).astype(o_ref.dtype)


def prepare_params(params, weight_dtype=jnp.bfloat16):
    """Cast weights to bf16 and zero-pad hidden/out dims up to a multiple of 128
    lanes. Zero padding is a mathematical no-op for this network."""
    in_f, hidden_f = params["w1"].shape
    out_f = params["w4"].shape[1]
    hidden_p = _round_up(hidden_f, _LANE)
    out_p = _round_up(out_f, _LANE)

    def pad2(a, rows, cols):
        return jnp.pad(a, ((0, rows - a.shape[0]), (0, cols - a.shape[1])))

    return {
        "w1": pad2(params["w1"], in_f, hidden_p).astype(weight_dtype),
        "b1": pad2(params["b1"], 1, hidden_p).astype(jnp.float32),
        "w2a": pad2(params["w2a"], hidden_p, hidden_p).astype(weight_dtype),
        "b2a": pad2(params["b2a"], 1, hidden_p).astype(jnp.float32),
        "w2b": pad2(params["w2b"], hidden_p, hidden_p).astype(weight_dtype),
        "b2b": pad2(params["b2b"], 1, hidden_p).astype(jnp.float32),
        "w3a": pad2(params["w3a"], hidden_p, hidden_p).astype(weight_dtype),
        "b3a": pad2(params["b3a"], 1, hidden_p).astype(jnp.float32),
        "w3b": pad2(params["w3b"], hidden_p, hidden_p).astype(weight_dtype),
        "b3b": pad2(params["b3b"], 1, hidden_p).astype(jnp.float32),
        "w4": pad2(params["w4"], hidden_p, out_p).astype(weight_dtype),
        "b4": pad2(params["b4"], 1, out_p).astype(jnp.float32),
    }


def _make_call(*, grid, block_batch, in_f, hidden_p, out_p, b_pad,
               single_buffer_weights, vmem_limit_bytes):
    if single_buffer_weights:
        def const_spec(shape):
            # Grid-invariant block: one VMEM buffer is enough (halves weight VMEM
            # vs. the default double-buffering; it is only DMA'd once anyway).
            return pl.BlockSpec(shape, lambda i: (0, 0),
                                pipeline_mode=pl.Buffered(1))
    else:
        def const_spec(shape):
            return pl.BlockSpec(shape, lambda i: (0, 0))

    in_specs = [
        pl.BlockSpec((block_batch, in_f), lambda i: (i, 0)),          # x: tile over batch
        const_spec((in_f, hidden_p)), const_spec((1, hidden_p)),      # linear1
        const_spec((hidden_p, hidden_p)), const_spec((1, hidden_p)),  # linear2 a
        const_spec((hidden_p, hidden_p)), const_spec((1, hidden_p)),  # linear2 b
        const_spec((hidden_p, hidden_p)), const_spec((1, hidden_p)),  # linear3 a
        const_spec((hidden_p, hidden_p)), const_spec((1, hidden_p)),  # linear3 b
        const_spec((hidden_p, out_p)), const_spec((1, out_p)),        # linear4
    ]
    out_specs = pl.BlockSpec((block_batch, out_p), lambda i: (i, 0))

    return pl.pallas_call(
        _linear_shortcut_kernel,
        out_shape=jax.ShapeDtypeStruct((b_pad, out_p), jnp.float32),
        grid_spec=pltpu.PrefetchScalarGridSpec(
            num_scalar_prefetch=0,
            grid=grid,
            in_specs=in_specs,
            out_specs=out_specs,
        ),
        compiler_params=pltpu.CompilerParams(
            dimension_semantics=("parallel",),   # batch tiles shard across TCs (v7x)
            vmem_limit_bytes=vmem_limit_bytes,
        ),
    )


def linear_with_shortcut(x, kernel_params, out_features, *, block_batch=256):
    """Pallas wrapper.

    x: (B, in_features) f32 (or bf16).
    kernel_params: output of prepare_params (bf16 weights, f32 biases, lane-padded).
    out_features: original (unpadded) output width; result is sliced back to it.
    """
    B, in_f = x.shape
    hidden_p = kernel_params["w1"].shape[1]
    out_p = kernel_params["w4"].shape[1]
    assert kernel_params["w1"].shape[0] == in_f

    # Batch tile: multiple of 8 sublanes, clamped for small batches. Pad the batch
    # so the grid always divides evenly (no partial / masked tiles).
    block_batch = min(int(block_batch), _round_up(B, _SUBLANE))
    block_batch = max(_SUBLANE, _round_up(block_batch, _SUBLANE))
    b_pad = _round_up(B, block_batch)
    if b_pad != B:
        x = jnp.pad(x, ((0, b_pad - B), (0, 0)))
    grid = (b_pad // block_batch,)

    def vmem_budget(weight_buffers):
        w_bytes = sum(int(v.size) * v.dtype.itemsize for v in kernel_params.values())
        x_tiles = 2 * block_batch * in_f * x.dtype.itemsize     # double-buffered x
        o_tiles = 2 * block_batch * out_p * 4                   # double-buffered out
        act = 6 * block_batch * hidden_p * 4                    # f32 activation working set
        total = weight_buffers * w_bytes + x_tiles + o_tiles + act + (4 << 20)
        # Keep a sane floor (default scoped limit) and stay under physical VMEM.
        return int(min(max(total, 32 << 20), 100 << 20))

    args = (x,) + tuple(kernel_params[k] for k in _WEIGHT_KEYS)

    try:
        call = _make_call(grid=grid, block_batch=block_batch, in_f=in_f,
                          hidden_p=hidden_p, out_p=out_p, b_pad=b_pad,
                          single_buffer_weights=True,
                          vmem_limit_bytes=vmem_budget(1))
        y = call(*args)
    except Exception:
        # Fallback if pipeline_mode=pl.Buffered(1) is unsupported in this jax build.
        call = _make_call(grid=grid, block_batch=block_batch, in_f=in_f,
                          hidden_p=hidden_p, out_p=out_p, b_pad=b_pad,
                          single_buffer_weights=False,
                          vmem_limit_bytes=vmem_budget(2))
        y = call(*args)

    return y[:B, :out_features]


def init_params(key, in_features, hidden_features, out_features):
    """Deterministic init mimicking torch.nn.Linear default (U[-1/sqrt(fan_in), 1/sqrt(fan_in)]).
    Weights stored as (in_dim, out_dim) — transposed relative to PyTorch."""
    dims = [
        ("w1", "b1", in_features, hidden_features),
        ("w2a", "b2a", hidden_features, hidden_features),
        ("w2b", "b2b", hidden_features, hidden_features),
        ("w3a", "b3a", hidden_features, hidden_features),
        ("w3b", "b3b", hidden_features, hidden_features),
        ("w4", "b4", hidden_features, out_features),
    ]
    params = {}
    for wname, bname, din, dout in dims:
        key, kw, kb = jax.random.split(key, 3)
        bound = 1.0 / (din ** 0.5)
        params[wname] = jax.random.uniform(
            kw, (din, dout), jnp.float32, minval=-bound, maxval=bound)
        params[bname] = jax.random.uniform(
            kb, (1, dout), jnp.float32, minval=-bound, maxval=bound)
    return params


def reference_forward(x, p):
    """Pure-JAX reference with the same mixed precision as the kernel
    (bf16 matmul operands, f32 accumulate / elementwise)."""
    bf16, f32 = jnp.bfloat16, jnp.float32

    def lin(v, w, b):
        return jnp.dot(v.astype(bf16), w.astype(bf16),
                       preferred_element_type=f32) + b

    relu = lambda v: jnp.maximum(v, 0.0)
    h = lin(x, p["w1"], p["b1"])
    t = lin(relu(h), p["w2a"], p["b2a"])
    t = lin(relu(t), p["w2b"], p["b2b"])
    h = h + t
    t = lin(relu(h), p["w3a"], p["b3a"])
    t = lin(relu(t), p["w3b"], p["b3b"])
    h = h + t
    y = lin(relu(h), p["w4"], p["b4"])
    return jax.nn.sigmoid(y)


if __name__ == "__main__":
    # Small shapes; hidden/out deliberately NOT multiples of 128 to exercise
    # the lane-padding path; batch tiled into 4 grid steps.
    in_features, hidden_features, out_features = 32, 96, 10
    batch = 256

    key = jax.random.PRNGKey(0)
    key, kx = jax.random.split(key)
    x = jax.random.normal(kx, (batch, in_features), jnp.float32)
    params = init_params(key, in_features, hidden_features, out_features)

    kernel_params = prepare_params(params)
    y = linear_with_shortcut(x, kernel_params, out_features, block_batch=64)
    y = jax.block_until_ready(y)

    y_ref = reference_forward(x, params)
    assert y.shape == (batch, out_features)
    max_err = float(jnp.max(jnp.abs(y - y_ref)))
    assert max_err < 3e-3, f"mismatch vs reference: max abs err {max_err}"

    print("KERNEL_OK")
</pallas_src>

<mosaic_0001>
module attributes {stable_mosaic.version = 11 : i64} {
  func.func @_linear_shortcut_kernel(%arg0: i32, %arg1: memref<64x32xf32, #tpu.memory_space<vmem>>, %arg2: memref<32x128xbf16, #tpu.memory_space<vmem>>, %arg3: memref<1x128xf32, #tpu.memory_space<vmem>>, %arg4: memref<128x128xbf16, #tpu.memory_space<vmem>>, %arg5: memref<1x128xf32, #tpu.memory_space<vmem>>, %arg6: memref<128x128xbf16, #tpu.memory_space<vmem>>, %arg7: memref<1x128xf32, #tpu.memory_space<vmem>>, %arg8: memref<128x128xbf16, #tpu.memory_space<vmem>>, %arg9: memref<1x128xf32, #tpu.memory_space<vmem>>, %arg10: memref<128x128xbf16, #tpu.memory_space<vmem>>, %arg11: memref<1x128xf32, #tpu.memory_space<vmem>>, %arg12: memref<128x128xbf16, #tpu.memory_space<vmem>>, %arg13: memref<1x128xf32, #tpu.memory_space<vmem>>, %arg14: memref<64x128xf32, #tpu.memory_space<vmem>>) attributes {dimension_semantics = [#tpu.dimension_semantics<parallel>], iteration_bounds = array<i64: 4>, scalar_prefetch = 0 : i64, scratch_operands = 0 : i64, tpu.core_type = #tpu.core_type<tc>, window_params = [{transform_indices = @transform_0, window_bounds = array<i64: 64, 32>}, {pipeline_mode = #tpu.pipeline_mode<synchronous>, transform_indices = @transform_1, window_bounds = array<i64: 32, 128>}, {pipeline_mode = #tpu.pipeline_mode<synchronous>, transform_indices = @transform_2, window_bounds = array<i64: 1, 128>}, {pipeline_mode = #tpu.pipeline_mode<synchronous>, transform_indices = @transform_3, window_bounds = array<i64: 128, 128>}, {pipeline_mode = #tpu.pipeline_mode<synchronous>, transform_indices = @transform_4, window_bounds = array<i64: 1, 128>}, {pipeline_mode = #tpu.pipeline_mode<synchronous>, transform_indices = @transform_5, window_bounds = array<i64: 128, 128>}, {pipeline_mode = #tpu.pipeline_mode<synchronous>, transform_indices = @transform_6, window_bounds = array<i64: 1, 128>}, {pipeline_mode = #tpu.pipeline_mode<synchronous>, transform_indices = @transform_7, window_bounds = array<i64: 128, 128>}, {pipeline_mode = #tpu.pipeline_mode<synchronous>, transform_indices = @transform_8, window_bounds = array<i64: 1, 128>}, {pipeline_mode = #tpu.pipeline_mode<synchronous>, transform_indices = @transform_9, window_bounds = array<i64: 128, 128>}, {pipeline_mode = #tpu.pipeline_mode<synchronous>, transform_indices = @transform_10, window_bounds = array<i64: 1, 128>}, {pipeline_mode = #tpu.pipeline_mode<synchronous>, transform_indices = @transform_11, window_bounds = array<i64: 128, 128>}, {pipeline_mode = #tpu.pipeline_mode<synchronous>, transform_indices = @transform_12, window_bounds = array<i64: 1, 128>}, {transform_indices = @transform_13, window_bounds = array<i64: 64, 128>}]} {
    %c0 = arith.constant 0 : index
    %c0_0 = arith.constant 0 : index
    %0 = vector.load %arg1[%c0, %c0_0] : memref<64x32xf32, #tpu.memory_space<vmem>>, vector<64x32xf32>
    %1 = arith.truncf %0 : vector<64x32xf32> to vector<64x32xbf16>
    %c0_1 = arith.constant 0 : index
    %c0_2 = arith.constant 0 : index
    %2 = vector.load %arg2[%c0_1, %c0_2] : memref<32x128xbf16, #tpu.memory_space<vmem>>, vector<32x128xbf16>
    %cst = arith.constant dense<0.000000e+00> : vector<64x128xf32>
    %3 = tpu.matmul %1, %2, %cst {dimension_numbers = #tpu.dot_dimension_numbers<[1], [0], [0], [1], [0, 0, 1, 1], [], []>} : vector<64x32xbf16>, vector<32x128xbf16>, vector<64x128xf32> -> vector<64x128xf32>
    %c0_3 = arith.constant 0 : index
    %c0_4 = arith.constant 0 : index
    %4 = vector.load %arg3[%c0_3, %c0_4] : memref<1x128xf32, #tpu.memory_space<vmem>>, vector<1x128xf32>
    %5 = vector.broadcast %4 : vector<1x128xf32> to vector<64x128xf32>
    %6 = arith.addf %3, %5 : vector<64x128xf32>
    %cst_5 = arith.constant 0.000000e+00 : f32
    %7 = vector.broadcast %cst_5 : f32 to vector<64x128xf32>
    %8 = arith.maximumf %6, %7 : vector<64x128xf32>
    %9 = arith.truncf %8 : vector<64x128xf32> to vector<64x128xbf16>
    %c0_6 = arith.constant 0 : index
    %c0_7 = arith.constant 0 : index
    %10 = vector.load %arg4[%c0_6, %c0_7] : memref<128x128xbf16, #tpu.memory_space<vmem>>, vector<128x128xbf16>
    %cst_8 = arith.constant dense<0.000000e+00> : vector<64x128xf32>
    %11 = tpu.matmul %9, %10, %cst_8 {dimension_numbers = #tpu.dot_dimension_numbers<[1], [0], [0], [1], [0, 0, 1, 1], [], []>} : vector<64x128xbf16>, vector<128x128xbf16>, vector<64x128xf32> -> vector<64x128xf32>
    %c0_9 = arith.constant 0 : index
    %c0_10 = arith.constant 0 : index
    %12 = vector.load %arg5[%c0_9, %c0_10] : memref<1x128xf32, #tpu.memory_space<vmem>>, vector<1x128xf32>
    %13 = vector.broadcast %12 : vector<1x128xf32> to vector<64x128xf32>
    %14 = arith.addf %11, %13 : vector<64x128xf32>
    %cst_11 = arith.constant 0.000000e+00 : f32
    %15 = vector.broadcast %cst_11 : f32 to vector<64x128xf32>
    %16 = arith.maximumf %14, %15 : vector<64x128xf32>
    %17 = arith.truncf %16 : vector<64x128xf32> to vector<64x128xbf16>
    %c0_12 = arith.constant 0 : index
    %c0_13 = arith.constant 0 : index
    %18 = vector.load %arg6[%c0_12, %c0_13] : memref<128x128xbf16, #tpu.memory_space<vmem>>, vector<128x128xbf16>
    %cst_14 = arith.constant dense<0.000000e+00> : vector<64x128xf32>
    %19 = tpu.matmul %17, %18, %cst_14 {dimension_numbers = #tpu.dot_dimension_numbers<[1], [0], [0], [1], [0, 0, 1, 1], [], []>} : vector<64x128xbf16>, vector<128x128xbf16>, vector<64x128xf32> -> vector<64x128xf32>
    %c0_15 = arith.constant 0 : index
    %c0_16 = arith.constant 0 : index
    %20 = vector.load %arg7[%c0_15, %c0_16] : memref<1x128xf32, #tpu.memory_space<vmem>>, vector<1x128xf32>
    %21 = vector.broadcast %20 : vector<1x128xf32> to vector<64x128xf32>
    %22 = arith.addf %19, %21 : vector<64x128xf32>
    %23 = arith.addf %6, %22 : vector<64x128xf32>
    %cst_17 = arith.constant 0.000000e+00 : f32
    %24 = vector.broadcast %cst_17 : f32 to vector<64x128xf32>
    %25 = arith.maximumf %23, %24 : vector<64x128xf32>
    %26 = arith.truncf %25 : vector<64x128xf32> to vector<64x128xbf16>
    %c0_18 = arith.constant 0 : index
    %c0_19 = arith.constant 0 : index
    %27 = vector.load %arg8[%c0_18, %c0_19] : memref<128x128xbf16, #tpu.memory_space<vmem>>, vector<128x128xbf16>
    %cst_20 = arith.constant dense<0.000000e+00> : vector<64x128xf32>
    %28 = tpu.matmul %26, %27, %cst_20 {dimension_numbers = #tpu.dot_dimension_numbers<[1], [0], [0], [1], [0, 0, 1, 1], [], []>} : vector<64x128xbf16>, vector<128x128xbf16>, vector<64x128xf32> -> vector<64x128xf32>
    %c0_21 = arith.constant 0 : index
    %c0_22 = arith.constant 0 : index
    %29 = vector.load %arg9[%c0_21, %c0_22] : memref<1x128xf32, #tpu.memory_space<vmem>>, vector<1x128xf32>
    %30 = vector.broadcast %29 : vector<1x128xf32> to vector<64x128xf32>
    %31 = arith.addf %28, %30 : vector<64x128xf32>
    %cst_23 = arith.constant 0.000000e+00 : f32
    %32 = vector.broadcast %cst_23 : f32 to vector<64x128xf32>
    %33 = arith.maximumf %31, %32 : vector<64x128xf32>
    %34 = arith.truncf %33 : vector<64x128xf32> to vector<64x128xbf16>
    %c0_24 = arith.constant 0 : index
    %c0_25 = arith.constant 0 : index
    %35 = vector.load %arg10[%c0_24, %c0_25] : memref<128x128xbf16, #tpu.memory_space<vmem>>, vector<128x128xbf16>
    %cst_26 = arith.constant dense<0.000000e+00> : vector<64x128xf32>
    %36 = tpu.matmul %34, %35, %cst_26 {dimension_numbers = #tpu.dot_dimension_numbers<[1], [0], [0], [1], [0, 0, 1, 1], [], []>} : vector<64x128xbf16>, vector<128x128xbf16>, vector<64x128xf32> -> vector<64x128xf32>
    %c0_27 = arith.constant 0 : index
    %c0_28 = arith.constant 0 : index
    %37 = vector.load %arg11[%c0_27, %c0_28] : memref<1x128xf32, #tpu.memory_space<vmem>>, vector<1x128xf32>
    %38 = vector.broadcast %37 : vector<1x128xf32> to vector<64x128xf32>
    %39 = arith.addf %36, %38 : vector<64x128xf32>
    %40 = arith.addf %23, %39 : vector<64x128xf32>
    %cst_29 = arith.constant 0.000000e+00 : f32
    %41 = vector.broadcast %cst_29 : f32 to vector<64x128xf32>
    %42 = arith.maximumf %40, %41 : vector<64x128xf32>
    %43 = arith.truncf %42 : vector<64x128xf32> to vector<64x128xbf16>
    %c0_30 = arith.constant 0 : index
    %c0_31 = arith.constant 0 : index
    %44 = vector.load %arg12[%c0_30, %c0_31] : memref<128x128xbf16, #tpu.memory_space<vmem>>, vector<128x128xbf16>
    %cst_32 = arith.constant dense<0.000000e+00> : vector<64x128xf32>
    %45 = tpu.matmul %43, %44, %cst_32 {dimension_numbers = #tpu.dot_dimension_numbers<[1], [0], [0], [1], [0, 0, 1, 1], [], []>} : vector<64x128xbf16>, vector<128x128xbf16>, vector<64x128xf32> -> vector<64x128xf32>
    %c0_33 = arith.constant 0 : index
    %c0_34 = arith.constant 0 : index
    %46 = vector.load %arg13[%c0_33, %c0_34] : memref<1x128xf32, #tpu.memory_space<vmem>>, vector<1x128xf32>
    %47 = vector.broadcast %46 : vector<1x128xf32> to vector<64x128xf32>
    %48 = arith.addf %45, %47 : vector<64x128xf32>
    %49 = arith.negf %48 : vector<64x128xf32>
    %50 = math.exp %49 : vector<64x128xf32>
    %cst_35 = arith.constant 1.000000e+00 : f32
    %51 = vector.broadcast %cst_35 : f32 to vector<64x128xf32>
    %52 = arith.addf %51, %50 : vector<64x128xf32>
    %53 = arith.divf %51, %52 : vector<64x128xf32>
    %c0_36 = arith.constant 0 : index
    %c0_37 = arith.constant 0 : index
    %54 = vector.load %arg14[%c0_36, %c0_37] : memref<64x128xf32, #tpu.memory_space<vmem>>, vector<64x128xf32>
    tpu.vector_store %arg14[%c0_36, %c0_37], %53 {strides = array<i32>} : memref<64x128xf32, #tpu.memory_space<vmem>>, vector<64x128xf32>,
    return
  }
  func.func @transform_0(%arg0: i32) -> (i32, i32) {
    %c0_i32 = arith.constant 0 : i32
    %c0_i32_0 = arith.constant 0 : i32
    return %arg0, %c0_i32 : i32, i32
  }
  func.func @transform_1(%arg0: i32) -> (i32, i32) {
    %c0_i32 = arith.constant 0 : i32
    %c0_i32_0 = arith.constant 0 : i32
    %c0_i32_1 = arith.constant 0 : i32
    return %c0_i32, %c0_i32_0 : i32, i32
  }
  func.func @transform_2(%arg0: i32) -> (i32, i32) {
    %c0_i32 = arith.constant 0 : i32
    %c0_i32_0 = arith.constant 0 : i32
    %c0_i32_1 = arith.constant 0 : i32
    return %c0_i32, %c0_i32_0 : i32, i32
  }
  func.func @transform_3(%arg0: i32) -> (i32, i32) {
    %c0_i32 = arith.constant 0 : i32
    %c0_i32_0 = arith.constant 0 : i32
    %c0_i32_1 = arith.constant 0 : i32
    return %c0_i32, %c0_i32_0 : i32, i32
  }
  func.func @transform_4(%arg0: i32) -> (i32, i32) {
    %c0_i32 = arith.constant 0 : i32
    %c0_i32_0 = arith.constant 0 : i32
    %c0_i32_1 = arith.constant 0 : i32
    return %c0_i32, %c0_i32_0 : i32, i32
  }
  func.func @transform_5(%arg0: i32) -> (i32, i32) {
    %c0_i32 = arith.constant 0 : i32
    %c0_i32_0 = arith.constant 0 : i32
    %c0_i32_1 = arith.constant 0 : i32
    return %c0_i32, %c0_i32_0 : i32, i32
  }
  func.func @transform_6(%arg0: i32) -> (i32, i32) {
    %c0_i32 = arith.constant 0 : i32
    %c0_i32_0 = arith.constant 0 : i32
    %c0_i32_1 = arith.constant 0 : i32
    return %c0_i32, %c0_i32_0 : i32, i32
  }
  func.func @transform_7(%arg0: i32) -> (i32, i32) {
    %c0_i32 = arith.constant 0 : i32
    %c0_i32_0 = arith.constant 0 : i32
    %c0_i32_1 = arith.constant 0 : i32
    return %c0_i32, %c0_i32_0 : i32, i32
  }
  func.func @transform_8(%arg0: i32) -> (i32, i32) {
    %c0_i32 = arith.constant 0 : i32
    %c0_i32_0 = arith.constant 0 : i32
    %c0_i32_1 = arith.constant 0 : i32
    return %c0_i32, %c0_i32_0 : i32, i32
  }
  func.func @transform_9(%arg0: i32) -> (i32, i32) {
    %c0_i32 = arith.constant 0 : i32
    %c0_i32_0 = arith.constant 0 : i32
    %c0_i32_1 = arith.constant 0 : i32
    return %c0_i32, %c0_i32_0 : i32, i32
  }
  func.func @transform_10(%arg0: i32) -> (i32, i32) {
    %c0_i32 = arith.constant 0 : i32
    %c0_i32_0 = arith.constant 0 : i32
    %c0_i32_1 = arith.constant 0 : i32
    return %c0_i32, %c0_i32_0 : i32, i32
  }
  func.func @transform_11(%arg0: i32) -> (i32, i32) {
    %c0_i32 = arith.constant 0 : i32
    %c0_i32_0 = arith.constant 0 : i32
    %c0_i32_1 = arith.constant 0 : i32
    return %c0_i32, %c0_i32_0 : i32, i32
  }
  func.func @transform_12(%arg0: i32) -> (i32, i32) {
    %c0_i32 = arith.constant 0 : i32
    %c0_i32_0 = arith.constant 0 : i32
    %c0_i32_1 = arith.constant 0 : i32
    return %c0_i32, %c0_i32_0 : i32, i32
  }
  func.func @transform_13(%arg0: i32) -> (i32, i32) {
    %c0_i32 = arith.constant 0 : i32
    %c0_i32_0 = arith.constant 0 : i32
    return %arg0, %c0_i32 : i32, i32
  }
}

module attributes {stable_mosaic.version = 11 : i64} {
  func.func @_linear_shortcut_kernel(%arg0: i32, %arg1: memref<64x32xf32, #tpu.memory_space<vmem>>, %arg2: memref<32x128xbf16, #tpu.memory_space<vmem>>, %arg3: memref<1x128xf32, #tpu.memory_space<vmem>>, %arg4: memref<128x128xbf16, #tpu.memory_space<vmem>>, %arg5: memref<1x128xf32, #tpu.memory_space<vmem>>, %arg6: memref<128x128xbf16, #tpu.memory_space<vmem>>, %arg7: memref<1x128xf32, #tpu.memory_space<vmem>>, %arg8: memref<128x128xbf16, #tpu.memory_space<vmem>>, %arg9: memref<1x128xf32, #tpu.memory_space<vmem>>, %arg10: memref<128x128xbf16, #tpu.memory_space<vmem>>, %arg11: memref<1x128xf32, #tpu.memory_space<vmem>>, %arg12: memref<128x128xbf16, #tpu.memory_space<vmem>>, %arg13: memref<1x128xf32, #tpu.memory_space<vmem>>, %arg14: memref<64x128xf32, #tpu.memory_space<vmem>>) attributes {dimension_semantics = [#tpu.dimension_semantics<parallel>], iteration_bounds = array<i64: 4>, scalar_prefetch = 0 : i64, scratch_operands = 0 : i64, tpu.core_type = #tpu.core_type<tc>, window_params = [{transform_indices = @transform_0, window_bounds = array<i64: 64, 32>}, {pipeline_mode = #tpu.pipeline_mode<synchronous>, transform_indices = @transform_1, window_bounds = array<i64: 32, 128>}, {pipeline_mode = #tpu.pipeline_mode<synchronous>, transform_indices = @transform_2, window_bounds = array<i64: 1, 128>}, {pipeline_mode = #tpu.pipeline_mode<synchronous>, transform_indices = @transform_3, window_bounds = array<i64: 128, 128>}, {pipeline_mode = #tpu.pipeline_mode<synchronous>, transform_indices = @transform_4, window_bounds = array<i64: 1, 128>}, {pipeline_mode = #tpu.pipeline_mode<synchronous>, transform_indices = @transform_5, window_bounds = array<i64: 128, 128>}, {pipeline_mode = #tpu.pipeline_mode<synchronous>, transform_indices = @transform_6, window_bounds = array<i64: 1, 128>}, {pipeline_mode = #tpu.pipeline_mode<synchronous>, transform_indices = @transform_7, window_bounds = array<i64: 128, 128>}, {pipeline_mode = #tpu.pipeline_mode<synchronous>, transform_indices = @transform_8, window_bounds = array<i64: 1, 128>}, {pipeline_mode = #tpu.pipeline_mode<synchronous>, transform_indices = @transform_9, window_bounds = array<i64: 128, 128>}, {pipeline_mode = #tpu.pipeline_mode<synchronous>, transform_indices = @transform_10, window_bounds = array<i64: 1, 128>}, {pipeline_mode = #tpu.pipeline_mode<synchronous>, transform_indices = @transform_11, window_bounds = array<i64: 128, 128>}, {pipeline_mode = #tpu.pipeline_mode<synchronous>, transform_indices = @transform_12, window_bounds = array<i64: 1, 128>}, {transform_indices = @transform_13, window_bounds = array<i64: 64, 128>}]} {
    %c0 = arith.constant 0 : index
    %c0_0 = arith.constant 0 : index
    %0 = vector.load %arg1[%c0, %c0_0] : memref<64x32xf32, #tpu.memory_space<vmem>>, vector<64x32xf32>
    %1 = arith.truncf %0 : vector<64x32xf32> to vector<64x32xbf16>
    %c0_1 = arith.constant 0 : index
    %c0_2 = arith.constant 0 : index
    %2 = vector.load %arg2[%c0_1, %c0_2] : memref<32x128xbf16, #tpu.memory_space<vmem>>, vector<32x128xbf16>
    %cst = arith.constant dense<0.000000e+00> : vector<64x128xf32>
    %3 = tpu.matmul %1, %2, %cst {dimension_numbers = #tpu.dot_dimension_numbers<[1], [0], [0], [1], [0, 0, 1, 1], [], []>} : vector<64x32xbf16>, vector<32x128xbf16>, vector<64x128xf32> -> vector<64x128xf32>
    %c0_3 = arith.constant 0 : index
    %c0_4 = arith.constant 0 : index
    %4 = vector.load %arg3[%c0_3, %c0_4] : memref<1x128xf32, #tpu.memory_space<vmem>>, vector<1x128xf32>
    %5 = vector.broadcast %4 : vector<1x128xf32> to vector<64x128xf32>
    %6 = arith.addf %3, %5 : vector<64x128xf32>
    %cst_5 = arith.constant 0.000000e+00 : f32
    %7 = vector.broadcast %cst_5 : f32 to vector<64x128xf32>
    %8 = arith.maximumf %6, %7 : vector<64x128xf32>
    %9 = arith.truncf %8 : vector<64x128xf32> to vector<64x128xbf16>
    %c0_6 = arith.constant 0 : index
    %c0_7 = arith.constant 0 : index
    %10 = vector.load %arg4[%c0_6, %c0_7] : memref<128x128xbf16, #tpu.memory_space<vmem>>, vector<128x128xbf16>
    %cst_8 = arith.constant dense<0.000000e+00> : vector<64x128xf32>
    %11 = tpu.matmul %9, %10, %cst_8 {dimension_numbers = #tpu.dot_dimension_numbers<[1], [0], [0], [1], [0, 0, 1, 1], [], []>} : vector<64x128xbf16>, vector<128x128xbf16>, vector<64x128xf32> -> vector<64x128xf32>
    %c0_9 = arith.constant 0 : index
    %c0_10 = arith.constant 0 : index
    %12 = vector.load %arg5[%c0_9, %c0_10] : memref<1x128xf32, #tpu.memory_space<vmem>>, vector<1x128xf32>
    %13 = vector.broadcast %12 : vector<1x128xf32> to vector<64x128xf32>
    %14 = arith.addf %11, %13 : vector<64x128xf32>
    %cst_11 = arith.constant 0.000000e+00 : f32
    %15 = vector.broadcast %cst_11 : f32 to vector<64x128xf32>
    %16 = arith.maximumf %14, %15 : vector<64x128xf32>
    %17 = arith.truncf %16 : vector<64x128xf32> to vector<64x128xbf16>
    %c0_12 = arith.constant 0 : index
    %c0_13 = arith.constant 0 : index
    %18 = vector.load %arg6[%c0_12, %c0_13] : memref<128x128xbf16, #tpu.memory_space<vmem>>, vector<128x128xbf16>
    %cst_14 = arith.constant dense<0.000000e+00> : vector<64x128xf32>
    %19 = tpu.matmul %17, %18, %cst_14 {dimension_numbers = #tpu.dot_dimension_numbers<[1], [0], [0], [1], [0, 0, 1, 1], [], []>} : vector<64x128xbf16>, vector<128x128xbf16>, vector<64x128xf32> -> vector<64x128xf32>
    %c0_15 = arith.constant 0 : index
    %c0_16 = arith.constant 0 : index
    %20 = vector.load %arg7[%c0_15, %c0_16] : memref<1x128xf32, #tpu.memory_space<vmem>>, vector<1x128xf32>
    %21 = vector.broadcast %20 : vector<1x128xf32> to vector<64x128xf32>
    %22 = arith.addf %19, %21 : vector<64x128xf32>
    %23 = arith.addf %6, %22 : vector<64x128xf32>
    %cst_17 = arith.constant 0.000000e+00 : f32
    %24 = vector.broadcast %cst_17 : f32 to vector<64x128xf32>
    %25 = arith.maximumf %23, %24 : vector<64x128xf32>
    %26 = arith.truncf %25 : vector<64x128xf32> to vector<64x128xbf16>
    %c0_18 = arith.constant 0 : index
    %c0_19 = arith.constant 0 : index
    %27 = vector.load %arg8[%c0_18, %c0_19] : memref<128x128xbf16, #tpu.memory_space<vmem>>, vector<128x128xbf16>
    %cst_20 = arith.constant dense<0.000000e+00> : vector<64x128xf32>
    %28 = tpu.matmul %26, %27, %cst_20 {dimension_numbers = #tpu.dot_dimension_numbers<[1], [0], [0], [1], [0, 0, 1, 1], [], []>} : vector<64x128xbf16>, vector<128x128xbf16>, vector<64x128xf32> -> vector<64x128xf32>
    %c0_21 = arith.constant 0 : index
    %c0_22 = arith.constant 0 : index
    %29 = vector.load %arg9[%c0_21, %c0_22] : memref<1x128xf32, #tpu.memory_space<vmem>>, vector<1x128xf32>
    %30 = vector.broadcast %29 : vector<1x128xf32> to vector<64x128xf32>
    %31 = arith.addf %28, %30 : vector<64x128xf32>
    %cst_23 = arith.constant 0.000000e+00 : f32
    %32 = vector.broadcast %cst_23 : f32 to vector<64x128xf32>
    %33 = arith.maximumf %31, %32 : vector<64x128xf32>
    %34 = arith.truncf %33 : vector<64x128xf32> to vector<64x128xbf16>
    %c0_24 = arith.constant 0 : index
    %c0_25 = arith.constant 0 : index
    %35 = vector.load %arg10[%c0_24, %c0_25] : memref<128x128xbf16, #tpu.memory_space<vmem>>, vector<128x128xbf16>
    %cst_26 = arith.constant dense<0.000000e+00> : vector<64x128xf32>
    %36 = tpu.matmul %34, %35, %cst_26 {dimension_numbers = #tpu.dot_dimension_numbers<[1], [0], [0], [1], [0, 0, 1, 1], [], []>} : vector<64x128xbf16>, vector<128x128xbf16>, vector<64x128xf32> -> vector<64x128xf32>
    %c0_27 = arith.constant 0 : index
    %c0_28 = arith.constant 0 : index
    %37 = vector.load %arg11[%c0_27, %c0_28] : memref<1x128xf32, #tpu.memory_space<vmem>>, vector<1x128xf32>
    %38 = vector.broadcast %37 : vector<1x128xf32> to vector<64x128xf32>
    %39 = arith.addf %36, %38 : vector<64x128xf32>
    %40 = arith.addf %23, %39 : vector<64x128xf32>
    %cst_29 = arith.constant 0.000000e+00 : f32
    %41 = vector.broadcast %cst_29 : f32 to vector<64x128xf32>
    %42 = arith.maximumf %40, %41 : vector<64x128xf32>
    %43 = arith.truncf %42 : vector<64x128xf32> to vector<64x128xbf16>
    %c0_30 = arith.constant 0 : index
    %c0_31 = arith.constant 0 : index
    %44 = vector.load %arg12[%c0_30, %c0_31] : memref<128x128xbf16, #tpu.memory_space<vmem>>, vector<128x128xbf16>
    %cst_32 = arith.constant dense<0.000000e+00> : vector<64x128xf32>
    %45 = tpu.matmul %43, %44, %cst_32 {dimension_numbers = #tpu.dot_dimension_numbers<[1], [0], [0], [1], [0, 0, 1, 1], [], []>} : vector<64x128xbf16>, vector<128x128xbf16>, vector<64x128xf32> -> vector<64x128xf32>
    %c0_33 = arith.constant 0 : index
    %c0_34 = arith.constant 0 : index
    %46 = vector.load %arg13[%c0_33, %c0_34] : memref<1x128xf32, #tpu.memory_space<vmem>>, vector<1x128xf32>
    %47 = vector.broadcast %46 : vector<1x128xf32> to vector<64x128xf32>
    %48 = arith.addf %45, %47 : vector<64x128xf32>
    %49 = arith.negf %48 : vector<64x128xf32>
    %50 = math.exp %49 : vector<64x128xf32>
    %cst_35 = arith.constant 1.000000e+00 : f32
    %51 = vector.broadcast %cst_35 : f32 to vector<64x128xf32>
    %52 = arith.addf %51, %50 : vector<64x128xf32>
    %53 = arith.divf %51, %52 : vector<64x128xf32>
    %c0_36 = arith.constant 0 : index
    %c0_37 = arith.constant 0 : index
    %54 = vector.load %arg14[%c0_36, %c0_37] : memref<64x128xf32, #tpu.memory_space<vmem>>, vector<64x128xf32>
    tpu.vector_store %arg14[%c0_36, %c0_37], %53 {strides = array<i32>} : memref<64x128xf32, #tpu.memory_space<vmem>>, vector<64x128xf32>,
    return
  }
  func.func @transform_0(%arg0: i32) -> (i32, i32) {
    %c0_i32 = arith.constant 0 : i32
    %c0_i32_0 = arith.constant 0 : i32
    return %arg0, %c0_i32 : i32, i32
  }
  func.func @transform_1(%arg0: i32) -> (i32, i32) {
    %c0_i32 = arith.constant 0 : i32
    %c0_i32_0 = arith.constant 0 : i32
    %c0_i32_1 = arith.constant 0 : i32
    return %c0_i32, %c0_i32_0 : i32, i32
  }
  func.func @transform_2(%arg0: i32) -> (i32, i32) {
    %c0_i32 = arith.constant 0 : i32
    %c0_i32_0 = arith.constant 0 : i32
    %c0_i32_1 = arith.constant 0 : i32
    return %c0_i32, %c0_i32_0 : i32, i32
  }
  func.func @transform_3(%arg0: i32) -> (i32, i32) {
    %c0_i32 = arith.constant 0 : i32
    %c0_i32_0 = arith.constant 0 : i32
    %c0_i32_1 = arith.constant 0 : i32
    return %c0_i32, %c0_i32_0 : i32, i32
  }
  func.func @transform_4(%arg0: i32) -> (i32, i32) {
    %c0_i32 = arith.constant 0 : i32
    %c0_i32_0 = arith.constant 0 : i32
    %c0_i32_1 = arith.constant 0 : i32
    return %c0_i32, %c0_i32_0 : i32, i32
  }
  func.func @transform_5(%arg0: i32) -> (i32, i32) {
    %c0_i32 = arith.constant 0 : i32
    %c0_i32_0 = arith.constant 0 : i32
    %c0_i32_1 = arith.constant 0 : i32
    return %c0_i32, %c0_i32_0 : i32, i32
  }
  func.func @transform_6(%arg0: i32) -> (i32, i32) {
    %c0_i32 = arith.constant 0 : i32
    %c0_i32_0 = arith.constant 0 : i32
    %c0_i32_1 = arith.constant 0 : i32
    return %c0_i32, %c0_i32_0 : i32, i32
  }
  func.func @transform_7(%arg0: i32) -> (i32, i32) {
    %c0_i32 = arith.constant 0 : i32
    %c0_i32_0 = arith.constant 0 : i32
    %c0_i32_1 = arith.constant 0 : i32
    return %c0_i32, %c0_i32_0 : i32, i32
  }
  func.func @transform_8(%arg0: i32) -> (i32, i32) {
    %c0_i32 = arith.constant 0 : i32
    %c0_i32_0 = arith.constant 0 : i32
    %c0_i32_1 = arith.constant 0 : i32
    return %c0_i32, %c0_i32_0 : i32, i32
  }
  func.func @transform_9(%arg0: i32) -> (i32, i32) {
    %c0_i32 = arith.constant 0 : i32
    %c0_i32_0 = arith.constant 0 : i32
    %c0_i32_1 = arith.constant 0 : i32
    return %c0_i32, %c0_i32_0 : i32, i32
  }
  func.func @transform_10(%arg0: i32) -> (i32, i32) {
    %c0_i32 = arith.constant 0 : i32
    %c0_i32_0 = arith.constant 0 : i32
    %c0_i32_1 = arith.constant 0 : i32
    return %c0_i32, %c0_i32_0 : i32, i32
  }
  func.func @transform_11(%arg0: i32) -> (i32, i32) {
    %c0_i32 = arith.constant 0 : i32
    %c0_i32_0 = arith.constant 0 : i32
    %c0_i32_1 = arith.constant 0 : i32
    return %c0_i32, %c0_i32_0 : i32, i32
  }
  func.func @transform_12(%arg0: i32) -> (i32, i32) {
    %c0_i32 = arith.constant 0 : i32
    %c0_i32_0 = arith.constant 0 : i32
    %c0_i32_1 = arith.constant 0 : i32
    return %c0_i32, %c0_i32_0 : i32, i32
  }
  func.func @transform_13(%arg0: i32) -> (i32, i32) {
    %c0_i32 = arith.constant 0 : i32
    %c0_i32_0 = arith.constant 0 : i32
    return %arg0, %c0_i32 : i32, i32
  }
}

</mosaic_0001>

<llo_original>
// kernel: tpu_custom_call.1
$region0: #{tpu_custom_call.1}
  #allocation0 [shape = 'u32[]', space=smem, size = 0x4, offset = 0x4, fixed_abs, tag = 'smem constant byte address 0x4 - core index']
  #allocation1 [shape = 'u32[72,128]{1,0:T(1,128)}', space=vmem, size = 0x9000, scoped, tag = 'internal scratch']
  %s0 = inlined_call_operand.vmem [shape: f32[256,32], index: 0, kind: input, shape index: {}]
  %s1 = inlined_call_operand.hbm [shape: bf16[32,128], index: 1, kind: input, shape index: {}]
  %s2 = inlined_call_operand.hbm [shape: f32[1,128], index: 2, kind: input, shape index: {}]
  %s3 = inlined_call_operand.vmem [shape: bf16[128,128], index: 3, kind: input, shape index: {}]
  %s4 = inlined_call_operand.vmem [shape: f32[1,128], index: 4, kind: input, shape index: {}]
  %s5 = inlined_call_operand.vmem [shape: bf16[128,128], index: 5, kind: input, shape index: {}]
  %s6 = inlined_call_operand.vmem [shape: f32[1,128], index: 6, kind: input, shape index: {}]
  %s7 = inlined_call_operand.vmem [shape: bf16[128,128], index: 7, kind: input, shape index: {}]
  %s8 = inlined_call_operand.vmem [shape: f32[1,128], index: 8, kind: input, shape index: {}]
  %s9 = inlined_call_operand.vmem [shape: bf16[128,128], index: 9, kind: input, shape index: {}]
  %s10 = inlined_call_operand.vmem [shape: f32[1,128], index: 10, kind: input, shape index: {}]
  %s11 = inlined_call_operand.vmem [shape: bf16[128,128], index: 11, kind: input, shape index: {}]
  %s12 = inlined_call_operand.vmem [shape: f32[1,128], index: 12, kind: input, shape index: {}]
  %s13 = inlined_call_operand.hbm [shape: f32[256,128], index: 13, kind: output, shape index: {}]
  %s14 = sld [smem:[#allocation0]]
  $region93: #{tpu_custom_call.1} parent=0
    _
  %s16 = ssub.s32 1, %s14
  %s17 = scalar_select 0, %s16, %s14
  $region1: #{tpu_custom_call.1} parent=0
    #allocation2 [shape = 'u8[8192]{0}', space=vmem, size = 0x2000, scoped, tag = 'input window, operand 1, single buffered']
    #allocation3 [shape = 's32[2]{0}', space=sflag, size = 0x8, scoped, tag = 'scoped memory for tpu_custom_call.1']
    #allocation4 [shape = 's32[2]{0}', space=sflag, size = 0x8, scoped, tag = 'scoped memory for tpu_custom_call.1']
    #allocation5 [shape = 'u8[512]{0}', space=vmem, size = 0x400, scoped, tag = 'input window, operand 2, single buffered']
    #allocation6 [shape = 's32[1]{0}', space=sflag, size = 0x4, scoped, tag = 'scoped memory for tpu_custom_call.1']
    #allocation7 [shape = 'u8[65536]{0}', space=vmem, size = 0x10000, scoped, tag = 'output window, operand 0']
    %18 = vsyncpa [#allocation3], 0
    %19 = vsyncpa [#allocation6], 0
    %20 = vsyncpa [#allocation4], 0
    %s21 = scalar_lea.sflag [#allocation4], 1
    %22 = vsyncpa %s21, 0
    loop: start=0, step=1, limit=6
    $region2: #{tpu_custom_call.1} parent=1 // loop_pre_header
      _
    $region3: #{tpu_custom_call.1} parent=1 // loop_header
      %s24 = sphi 0, %s28
      %p25 = scmp.ge.s32.totalorder %s24, 6
      %s34 = sphi 0, %s36
      %s37 = sphi 0, %s34
      %s38 = sphi 0, %s37
      %s54 = sphi 0, %s38
      %s58 = sphi 0, %s58
      %s60 = sphi 0, %s58
      %s61 = sphi 0, %s60
      %s75 = sphi 0, %s61
      %s79 = sphi 0, %s79
      %s81 = sphi 0, %s79
      %s82 = sphi 0, %s81
      %s96 = sphi 0, %s82
      %s100 = sphi 0, %s100
      %s102 = sphi 0, %s100
      %s103 = sphi 0, %s102
      %s117 = sphi 0, %s103
      %s121 = sphi 0, %s121
      %s123 = sphi 0, %s121
      %s124 = sphi 0, %s123
      %s138 = sphi 0, %s124
      %s142 = sphi 0, %s142
      %s144 = sphi 0, %s142
      %s145 = sphi 0, %s144
      %s159 = sphi 0, %s145
      %s163 = sphi 0, %s163
      %s165 = sphi 0, %s163
      %s166 = sphi 0, %s165
      %s180 = sphi 0, %s166
      %s184 = sphi 0, %s184
      %s186 = sphi 0, %s184
      %s187 = sphi 0, %s186
      %s201 = sphi 0, %s187
      %s205 = sphi 0, %s205
      %s207 = sphi 0, %s205
      %s208 = sphi 0, %s207
      %s222 = sphi 0, %s208
      %s226 = sphi 0, %s226
      %s228 = sphi 0, %s226
      %s229 = sphi 0, %s228
      %s243 = sphi 0, %s229
      %s247 = sphi 0, %s247
      %s249 = sphi 0, %s247
      %s250 = sphi 0, %s249
      %s264 = sphi 0, %s250
      %s268 = sphi 0, %s268
      %s270 = sphi 0, %s268
      %s271 = sphi 0, %s270
      %s285 = sphi 0, %s271
      %s289 = sphi 0, %s289
      %s291 = sphi 0, %s289
      %s292 = sphi 0, %s291
      %s306 = sphi 0, %s292
      %s312 = sphi 0, %s314
      %s315 = sphi 0, %s312
      %s316 = sphi 0, %s315
      %s332 = sphi 0, %s316
    $region4: #{tpu_custom_call.1} parent=1 // loop_header_branch
      %27 = sbr.rel (%p25) target = $region8
    $region5: #{tpu_custom_call.1} parent=1 // loop_body
      %s29 = ssub.s32 %s24, 1
      %s30 = ssub.s32 %s24, 2
      %s31 = sadd.s32 %s24, 1
      %s32 = ssub.s32 %s24, %s31
      %p33 = scmp.eq.s32.totalorder %s32, 0
      %s35 = sadd.s32 %s34, 1
      %s36 = scalar_select %p33, %s34, %s35
      %p39 = pneg %p33
      %p40 = scmp.eq.s32.totalorder %s24, 3
      %p41 = por %p39, %p40
      %p42 = scmp.ne.s32.totalorder %s34, %s37
      %p43 = scmp.eq.s32.totalorder %s24, 0
      %p44 = por %p42, %p43
      %p45 = scmp.ne.s32.totalorder %s34, %s37
      %p46 = scmp.eq.s32.totalorder %s29, 3
      %p47 = por %p45, %p46
      %p48 = scmp.ne.s32.totalorder %s37, %s38
      %p49 = scmp.eq.s32.totalorder %s29, 0
      %p50 = por %p48, %p49
      %p51 = scmp.ne.s32.totalorder %s37, %s38
      %p52 = scmp.eq.s32.totalorder %s30, 3
      %p53 = por %p51, %p52
      %p55 = scmp.ne.s32.totalorder %s38, %s54
      %p56 = scmp.eq.s32.totalorder %s30, 0
      %p57 = por %p55, %p56
      %s59 = sadd.s32 %s58, 1
      %p62 = scmp.eq.s32.totalorder %s24, 3
      %p63 = scmp.ne.s32.totalorder %s58, %s60
      %p64 = scmp.eq.s32.totalorder %s24, 0
      %p65 = por %p63, %p64
      %p66 = scmp.ne.s32.totalorder %s58, %s60
      %p67 = scmp.eq.s32.totalorder %s29, 3
      %p68 = por %p66, %p67
      %p69 = scmp.ne.s32.totalorder %s60, %s61
      %p70 = scmp.eq.s32.totalorder %s29, 0
      %p71 = por %p69, %p70
      %p72 = scmp.ne.s32.totalorder %s60, %s61
      %p73 = scmp.eq.s32.totalorder %s30, 3
      %p74 = por %p72, %p73
      %p76 = scmp.ne.s32.totalorder %s61, %s75
      %p77 = scmp.eq.s32.totalorder %s30, 0
      %p78 = por %p76, %p77
      %s80 = sadd.s32 %s79, 1
      %p83 = scmp.eq.s32.totalorder %s24, 3
      %p84 = scmp.ne.s32.totalorder %s79, %s81
      %p85 = scmp.eq.s32.totalorder %s24, 0
      %p86 = por %p84, %p85
      %p87 = scmp.ne.s32.totalorder %s79, %s81
      %p88 = scmp.eq.s32.totalorder %s29, 3
      %p89 = por %p87, %p88
      %p90 = scmp.ne.s32.totalorder %s81, %s82
      %p91 = scmp.eq.s32.totalorder %s29, 0
      %p92 = por %p90, %p91
      %p93 = scmp.ne.s32.totalorder %s81, %s82
      %p94 = scmp.eq.s32.totalorder %s30, 3
      %p95 = por %p93, %p94
      %p97 = scmp.ne.s32.totalorder %s82, %s96
      %p98 = scmp.eq.s32.totalorder %s30, 0
      %p99 = por %p97, %p98
      %s101 = sadd.s32 %s100, 1
      %p104 = scmp.eq.s32.totalorder %s24, 3
      %p105 = scmp.ne.s32.totalorder %s100, %s102
      %p106 = scmp.eq.s32.totalorder %s24, 0
      %p107 = por %p105, %p106
      %p108 = scmp.ne.s32.totalorder %s100, %s102
      %p109 = scmp.eq.s32.totalorder %s29, 3
      %p110 = por %p108, %p109
      %p111 = scmp.ne.s32.totalorder %s102, %s103
      %p112 = scmp.eq.s32.totalorder %s29, 0
      %p113 = por %p111, %p112
      %p114 = scmp.ne.s32.totalorder %s102, %s103
      %p115 = scmp.eq.s32.totalorder %s30, 3
      %p116 = por %p114, %p115
      %p118 = scmp.ne.s32.totalorder %s103, %s117
      %p119 = scmp.eq.s32.totalorder %s30, 0
      %p120 = por %p118, %p119
      %s122 = sadd.s32 %s121, 1
      %p125 = scmp.eq.s32.totalorder %s24, 3
      %p126 = scmp.ne.s32.totalorder %s121, %s123
      %p127 = scmp.eq.s32.totalorder %s24, 0
      %p128 = por %p126, %p127
      %p129 = scmp.ne.s32.totalorder %s121, %s123
      %p130 = scmp.eq.s32.totalorder %s29, 3
      %p131 = por %p129, %p130
      %p132 = scmp.ne.s32.totalorder %s123, %s124
      %p133 = scmp.eq.s32.totalorder %s29, 0
      %p134 = por %p132, %p133
      %p135 = scmp.ne.s32.totalorder %s123, %s124
      %p136 = scmp.eq.s32.totalorder %s30, 3
      %p137 = por %p135, %p136
      %p139 = scmp.ne.s32.totalorder %s124, %s138
      %p140 = scmp.eq.s32.totalorder %s30, 0
      %p141 = por %p139, %p140
      %s143 = sadd.s32 %s142, 1
      %p146 = scmp.eq.s32.totalorder %s24, 3
      %p147 = scmp.ne.s32.totalorder %s142, %s144
      %p148 = scmp.eq.s32.totalorder %s24, 0
      %p149 = por %p147, %p148
      %p150 = scmp.ne.s32.totalorder %s142, %s144
      %p151 = scmp.eq.s32.totalorder %s29, 3
      %p152 = por %p150, %p151
      %p153 = scmp.ne.s32.totalorder %s144, %s145
      %p154 = scmp.eq.s32.totalorder %s29, 0
      %p155 = por %p153, %p154
      %p156 = scmp.ne.s32.totalorder %s144, %s145
      %p157 = scmp.eq.s32.totalorder %s30, 3
      %p158 = por %p156, %p157
      %p160 = scmp.ne.s32.totalorder %s145, %s159
      %p161 = scmp.eq.s32.totalorder %s30, 0
      %p162 = por %p160, %p161
      %s164 = sadd.s32 %s163, 1
      %p167 = scmp.eq.s32.totalorder %s24, 3
      %p168 = scmp.ne.s32.totalorder %s163, %s165
      %p169 = scmp.eq.s32.totalorder %s24, 0
      %p170 = por %p168, %p169
      %p171 = scmp.ne.s32.totalorder %s163, %s165
      %p172 = scmp.eq.s32.totalorder %s29, 3
      %p173 = por %p171, %p172
      %p174 = scmp.ne.s32.totalorder %s165, %s166
      %p175 = scmp.eq.s32.totalorder %s29, 0
      %p176 = por %p174, %p175
      %p177 = scmp.ne.s32.totalorder %s165, %s166
      %p178 = scmp.eq.s32.totalorder %s30, 3
      %p179 = por %p177, %p178
      %p181 = scmp.ne.s32.totalorder %s166, %s180
      %p182 = scmp.eq.s32.totalorder %s30, 0
      %p183 = por %p181, %p182
      %s185 = sadd.s32 %s184, 1
      %p188 = scmp.eq.s32.totalorder %s24, 3
      %p189 = scmp.ne.s32.totalorder %s184, %s186
      %p190 = scmp.eq.s32.totalorder %s24, 0
      %p191 = por %p189, %p190
      %p192 = scmp.ne.s32.totalorder %s184, %s186
      %p193 = scmp.eq.s32.totalorder %s29, 3
      %p194 = por %p192, %p193
      %p195 = scmp.ne.s32.totalorder %s186, %s187
      %p196 = scmp.eq.s32.totalorder %s29, 0
      %p197 = por %p195, %p196
      %p198 = scmp.ne.s32.totalorder %s186, %s187
      %p199 = scmp.eq.s32.totalorder %s30, 3
      %p200 = por %p198, %p199
      %p202 = scmp.ne.s32.totalorder %s187, %s201
      %p203 = scmp.eq.s32.totalorder %s30, 0
      %p204 = por %p202, %p203
      %s206 = sadd.s32 %s205, 1
      %p209 = scmp.eq.s32.totalorder %s24, 3
      %p210 = scmp.ne.s32.totalorder %s205, %s207
      %p211 = scmp.eq.s32.totalorder %s24, 0
      %p212 = por %p210, %p211
      %p213 = scmp.ne.s32.totalorder %s205, %s207
      %p214 = scmp.eq.s32.totalorder %s29, 3
      %p215 = por %p213, %p214
      %p216 = scmp.ne.s32.totalorder %s207, %s208
      %p217 = scmp.eq.s32.totalorder %s29, 0
      %p218 = por %p216, %p217
      %p219 = scmp.ne.s32.totalorder %s207, %s208
      %p220 = scmp.eq.s32.totalorder %s30, 3
      %p221 = por %p219, %p220
      %p223 = scmp.ne.s32.totalorder %s208, %s222
      %p224 = scmp.eq.s32.totalorder %s30, 0
      %p225 = por %p223, %p224
      %s227 = sadd.s32 %s226, 1
      %p230 = scmp.eq.s32.totalorder %s24, 3
      %p231 = scmp.ne.s32.totalorder %s226, %s228
      %p232 = scmp.eq.s32.totalorder %s24, 0
      %p233 = por %p231, %p232
      %p234 = scmp.ne.s32.totalorder %s226, %s228
      %p235 = scmp.eq.s32.totalorder %s29, 3
      %p236 = por %p234, %p235
      %p237 = scmp.ne.s32.totalorder %s228, %s229
      %p238 = scmp.eq.s32.totalorder %s29, 0
      %p239 = por %p237, %p238
      %p240 = scmp.ne.s32.totalorder %s228, %s229
      %p241 = scmp.eq.s32.totalorder %s30, 3
      %p242 = por %p240, %p241
      %p244 = scmp.ne.s32.totalorder %s229, %s243
      %p245 = scmp.eq.s32.totalorder %s30, 0
      %p246 = por %p244, %p245
      %s248 = sadd.s32 %s247, 1
      %p251 = scmp.eq.s32.totalorder %s24, 3
      %p252 = scmp.ne.s32.totalorder %s247, %s249
      %p253 = scmp.eq.s32.totalorder %s24, 0
      %p254 = por %p252, %p253
      %p255 = scmp.ne.s32.totalorder %s247, %s249
      %p256 = scmp.eq.s32.totalorder %s29, 3
      %p257 = por %p255, %p256
      %p258 = scmp.ne.s32.totalorder %s249, %s250
      %p259 = scmp.eq.s32.totalorder %s29, 0
      %p260 = por %p258, %p259
      %p261 = scmp.ne.s32.totalorder %s249, %s250
      %p262 = scmp.eq.s32.totalorder %s30, 3
      %p263 = por %p261, %p262
      %p265 = scmp.ne.s32.totalorder %s250, %s264
      %p266 = scmp.eq.s32.totalorder %s30, 0
      %p267 = por %p265, %p266
      %s269 = sadd.s32 %s268, 1
      %p272 = scmp.eq.s32.totalorder %s24, 3
      %p273 = scmp.ne.s32.totalorder %s268, %s270
      %p274 = scmp.eq.s32.totalorder %s24, 0
      %p275 = por %p273, %p274
      %p276 = scmp.ne.s32.totalorder %s268, %s270
      %p277 = scmp.eq.s32.totalorder %s29, 3
      %p278 = por %p276, %p277
      %p279 = scmp.ne.s32.totalorder %s270, %s271
      %p280 = scmp.eq.s32.totalorder %s29, 0
      %p281 = por %p279, %p280
      %p282 = scmp.ne.s32.totalorder %s270, %s271
      %p283 = scmp.eq.s32.totalorder %s30, 3
      %p284 = por %p282, %p283
      %p286 = scmp.ne.s32.totalorder %s271, %s285
      %p287 = scmp.eq.s32.totalorder %s30, 0
      %p288 = por %p286, %p287
      %s290 = sadd.s32 %s289, 1
      %p293 = scmp.eq.s32.totalorder %s24, 3
      %p294 = scmp.ne.s32.totalorder %s289, %s291
      %p295 = scmp.eq.s32.totalorder %s24, 0
      %p296 = por %p294, %p295
      %p297 = scmp.ne.s32.totalorder %s289, %s291
      %p298 = scmp.eq.s32.totalorder %s29, 3
      %p299 = por %p297, %p298
      %p300 = scmp.ne.s32.totalorder %s291, %s292
      %p301 = scmp.eq.s32.totalorder %s29, 0
      %p302 = por %p300, %p301
      %p303 = scmp.ne.s32.totalorder %s291, %s292
      %p304 = scmp.eq.s32.totalorder %s30, 3
      %p305 = por %p303, %p304
      %p307 = scmp.ne.s32.totalorder %s292, %s306
      %p308 = scmp.eq.s32.totalorder %s30, 0
      %p309 = por %p307, %p308
      %s310 = ssub.s32 %s24, %s31
      %p311 = scmp.eq.s32.totalorder %s310, 0
      %s313 = sadd.s32 %s312, 1
      %s314 = scalar_select %p311, %s312, %s313
      %p317 = pneg %p311
      %p318 = scmp.eq.s32.totalorder %s24, 3
      %p319 = por %p317, %p318
      %p320 = scmp.ne.s32.totalorder %s312, %s315
      %p321 = scmp.eq.s32.totalorder %s24, 0
      %p322 = por %p320, %p321
      %p323 = scmp.ne.s32.totalorder %s312, %s315
      %p324 = scmp.eq.s32.totalorder %s29, 3
      %p325 = por %p323, %p324
      %p326 = scmp.ne.s32.totalorder %s315, %s316
      %p327 = scmp.eq.s32.totalorder %s29, 0
      %p328 = por %p326, %p327
      %p329 = scmp.ne.s32.totalorder %s315, %s316
      %p330 = scmp.eq.s32.totalorder %s30, 3
      %p331 = por %p329, %p330
      %p333 = scmp.ne.s32.totalorder %s316, %s332
      %p334 = scmp.eq.s32.totalorder %s30, 0
      %p335 = por %p333, %p334
      %p336 = scmp.le.s32.totalorder 1, %s24
      %p337 = scmp.lt.s32.totalorder %s24, 5
      %p338 = pnand %p336, %p337
      %p339 = pneg %p338
      // Predicated region
      $region9: #{tpu_custom_call.1} parent=5 // pred_check
        _
      $region10: #{tpu_custom_call.1} parent=5 // pred_check_branch
        %341 = sbr.rel (%p338) target = $region12
      $region11: #{tpu_custom_call.1} parent=5 // pred_region
        %s342 = ssub.s32 %s24, 1
        // Predicated region
        $region13: #{tpu_custom_call.1} parent=11 // pred_check
          %p343 = pneg %p71
        $region14: #{tpu_custom_call.1} parent=11 // pred_check_branch
          %345 = sbr.rel (%p343) target = $region16
        $region15: #{tpu_custom_call.1} parent=11 // pred_region
          %347 = vsyncadd [#allocation3], 0
          %s348 = sshll.u32 %s1, 4
          %s349 = int_to_ptr.hbm [resolvable:$true] %s348
          %s350 = sshll.u32 [#allocation2], 4
          %s351 = int_to_ptr.vmem [resolvable:$true] %s350
          %356 = dma.hbm_to_vmem [thread:$0]  %s349, 256, %s351, [#allocation3], 64, 64, 4
        $region16: #{tpu_custom_call.1} parent=11 // pred_fallthru
          _
        // Predicated region
        $region17: #{tpu_custom_call.1} parent=11 // pred_check
          %p357 = pneg %p92
        $region18: #{tpu_custom_call.1} parent=11 // pred_check_branch
          %359 = sbr.rel (%p357) target = $region20
        $region19: #{tpu_custom_call.1} parent=11 // pred_region
          %361 = vsyncadd [#allocation6], 0
          %s363 = sshll.u32 %s2, 4
          %s364 = int_to_ptr.hbm [resolvable:$true] %s363
          %s365 = sshll.u32 [#allocation5], 4
          %s366 = int_to_ptr.vmem [resolvable:$true] %s365
          %368 = dma.hbm_to_vmem [thread:$0]  %s364, 16, %s366, [#allocation6]
        $region20: #{tpu_custom_call.1} parent=11 // pred_fallthru
          _
        // Predicated region
        $region21: #{tpu_custom_call.1} parent=11 // pred_check
          %p369 = pneg %p113
        $region22: #{tpu_custom_call.1} parent=11 // pred_check_branch
          %371 = sbr.rel (%p369) target = $region24
        $region23: #{tpu_custom_call.1} parent=11 // pred_region
          _
        $region24: #{tpu_custom_call.1} parent=11 // pred_fallthru
          _
        // Predicated region
        $region25: #{tpu_custom_call.1} parent=11 // pred_check
          %p372 = pneg %p134
        $region26: #{tpu_custom_call.1} parent=11 // pred_check_branch
          %374 = sbr.rel (%p372) target = $region28
        $region27: #{tpu_custom_call.1} parent=11 // pred_region
          _
        $region28: #{tpu_custom_call.1} parent=11 // pred_fallthru
          _
        // Predicated region
        $region29: #{tpu_custom_call.1} parent=11 // pred_check
          %p375 = pneg %p155
        $region30: #{tpu_custom_call.1} parent=11 // pred_check_branch
          %377 = sbr.rel (%p375) target = $region32
        $region31: #{tpu_custom_call.1} parent=11 // pred_region
          _
        $region32: #{tpu_custom_call.1} parent=11 // pred_fallthru
          _
        // Predicated region
        $region33: #{tpu_custom_call.1} parent=11 // pred_check
          %p378 = pneg %p176
        $region34: #{tpu_custom_call.1} parent=11 // pred_check_branch
          %380 = sbr.rel (%p378) target = $region36
        $region35: #{tpu_custom_call.1} parent=11 // pred_region
          _
        $region36: #{tpu_custom_call.1} parent=11 // pred_fallthru
          _
        // Predicated region
        $region37: #{tpu_custom_call.1} parent=11 // pred_check
          %p381 = pneg %p197
        $region38: #{tpu_custom_call.1} parent=11 // pred_check_branch
          %383 = sbr.rel (%p381) target = $region40
        $region39: #{tpu_custom_call.1} parent=11 // pred_region
          _
        $region40: #{tpu_custom_call.1} parent=11 // pred_fallthru
          _
        // Predicated region
        $region41: #{tpu_custom_call.1} parent=11 // pred_check
          %p384 = pneg %p218
        $region42: #{tpu_custom_call.1} parent=11 // pred_check_branch
          %386 = sbr.rel (%p384) target = $region44
        $region43: #{tpu_custom_call.1} parent=11 // pred_region
          _
        $region44: #{tpu_custom_call.1} parent=11 // pred_fallthru
          _
        // Predicated region
        $region45: #{tpu_custom_call.1} parent=11 // pred_check
          %p387 = pneg %p239
        $region46: #{tpu_custom_call.1} parent=11 // pred_check_branch
          %389 = sbr.rel (%p387) target = $region48
        $region47: #{tpu_custom_call.1} parent=11 // pred_region
          _
        $region48: #{tpu_custom_call.1} parent=11 // pred_fallthru
          _
        // Predicated region
        $region49: #{tpu_custom_call.1} parent=11 // pred_check
          %p390 = pneg %p260
        $region50: #{tpu_custom_call.1} parent=11 // pred_check_branch
          %392 = sbr.rel (%p390) target = $region52
        $region51: #{tpu_custom_call.1} parent=11 // pred_region
          _
        $region52: #{tpu_custom_call.1} parent=11 // pred_fallthru
          _
        // Predicated region
        $region53: #{tpu_custom_call.1} parent=11 // pred_check
          %p393 = pneg %p281
        $region54: #{tpu_custom_call.1} parent=11 // pred_check_branch
          %395 = sbr.rel (%p393) target = $region56
        $region55: #{tpu_custom_call.1} parent=11 // pred_region
          _
        $region56: #{tpu_custom_call.1} parent=11 // pred_fallthru
          _
        // Predicated region
        $region57: #{tpu_custom_call.1} parent=11 // pred_check
          %p396 = pneg %p302
        $region58: #{tpu_custom_call.1} parent=11 // pred_check_branch
          %398 = sbr.rel (%p396) target = $region60
        $region59: #{tpu_custom_call.1} parent=11 // pred_region
          _
        $region60: #{tpu_custom_call.1} parent=11 // pred_fallthru
          _
      $region12: #{tpu_custom_call.1} parent=5 // pred_fallthru
        _
      %p399 = scmp.lt.s32.totalorder %s24, 4
      // Predicated region
      $region61: #{tpu_custom_call.1} parent=5 // pred_check
        %p400 = pneg %p399
      $region62: #{tpu_custom_call.1} parent=5 // pred_check_branch
        %402 = sbr.rel (%p400) target = $region64
      $region63: #{tpu_custom_call.1} parent=5 // pred_region
        // Predicated region
        $region65: #{tpu_custom_call.1} parent=63 // pred_check
          %p403 = pneg %p44
        $region66: #{tpu_custom_call.1} parent=63 // pred_check_branch
          %405 = sbr.rel (%p403) target = $region68
        $region67: #{tpu_custom_call.1} parent=63 // pred_region
          %s406 = smul.u32 8, %s24
          %p407 = scmp.lt.s32.totalorder %s406, 31
          %s408 = scalar_select %p407, %s406, 31
          %s409 = smul.addr %s408, 8
          %s410 = scalar_lea.vmem %s0, %s409
          %s411 = smul.u32 8, %s24
        $region68: #{tpu_custom_call.1} parent=63 // pred_fallthru
          _
      $region64: #{tpu_custom_call.1} parent=5 // pred_fallthru
        _
      %p412 = scmp.le.s32.totalorder 1, %s24
      %p413 = scmp.lt.s32.totalorder %s24, 5
      %p414 = pnand %p412, %p413
      %p415 = pneg %p414
      // Predicated region
      $region69: #{tpu_custom_call.1} parent=5 // pred_check
        _
      $region70: #{tpu_custom_call.1} parent=5 // pred_check_branch
        %417 = sbr.rel (%p414) target = $region72
      $region71: #{tpu_custom_call.1} parent=5 // pred_region
        %s418 = ssub.s32 %s24, 1
        // Predicated region
        $region73: #{tpu_custom_call.1} parent=71 // pred_check
          %p419 = pneg %p71
        $region74: #{tpu_custom_call.1} parent=71 // pred_check_branch
          %421 = sbr.rel (%p419) target = $region76
        $region75: #{tpu_custom_call.1} parent=71 // pred_region
          %423 = dma.done [#allocation3], 256
        $region76: #{tpu_custom_call.1} parent=71 // pred_fallthru
          _
        // Predicated region
        $region77: #{tpu_custom_call.1} parent=71 // pred_check
          %p424 = pneg %p92
        $region78: #{tpu_custom_call.1} parent=71 // pred_check_branch
          %426 = sbr.rel (%p424) target = $region80
        $region79: #{tpu_custom_call.1} parent=71 // pred_region
          %428 = dma.done [#allocation6], 16
        $region80: #{tpu_custom_call.1} parent=71 // pred_fallthru
          _
        %s429 = smul.u32 8, %s29
        %p430 = scmp.lt.s32.totalorder %s429, 31
        %s431 = scalar_select %p430, %s429, 31
        %s432 = smul.addr %s431, 8
        %s433 = scalar_lea.vmem %s0, %s432
        %p434 = pneg %p50
        %p435 = pneg %p47
        %p436 = pneg %p71
        %p437 = pneg %p68
        %p438 = pneg %p92
        %p439 = pneg %p89
        %p440 = pneg %p113
        %p441 = pneg %p110
        %p442 = pneg %p134
        %p443 = pneg %p131
        %p444 = pneg %p155
        %p445 = pneg %p152
        %p446 = pneg %p176
        %p447 = pneg %p173
        %p448 = pneg %p197
        %p449 = pneg %p194
        %p450 = pneg %p218
        %p451 = pneg %p215
        %p452 = pneg %p239
        %p453 = pneg %p236
        %p454 = pneg %p260
        %p455 = pneg %p257
        %p456 = pneg %p281
        %p457 = pneg %p278
        %p458 = pneg %p302
        %p459 = pneg %p299
        %p460 = pneg %p328
        %p461 = pneg %p325
        %s462 = sand.u32 %s315, 1
        %s463 = scalar_lea.sflag [#allocation4], %s462
        %s464 = sand.u32 %s315, 1
        %s465 = smul.addr %s464, 64
        %s466 = scalar_lea.vmem [#allocation7], %s465
        %s467 = smul.u32 8, %s29
        %p468 = scmp.lt.s32.totalorder %s467, 31
        %s469 = scalar_select %p468, %s467, 31
        %s470 = smul.addr %s469, 8
        %s471 = scalar_lea.vmem %s0, %s470
        %s472 = smul.u32 8, %s29
        %s473 = smul.u32 8, %s29
        %v475 = vld [vmem:[%s471] sm:$0xff]
        %v476 = vld [vmem:[%s471 + $0x8] sm:$0xff]
        %v477 = vld [vmem:[%s471 + $0x10] sm:$0xff]
        %v478 = vld [vmem:[%s471 + $0x18] sm:$0xff]
        %v479 = vld [vmem:[%s471 + $0x20] sm:$0xff]
        %v480 = vld [vmem:[%s471 + $0x28] sm:$0xff]
        %v481 = vld [vmem:[%s471 + $0x30] sm:$0xff]
        %v482 = vld [vmem:[%s471 + $0x38] sm:$0xff]
        %v483 = vpack.c.bf16 %v476, %v475
        %v484 = vpack.c.bf16 %v478, %v477
        %v485 = vpack.c.bf16 %v480, %v479
        %v486 = vpack.c.bf16 %v482, %v481
        %v487 = vld [vmem:[#allocation2] sm:$0xf]
        %v488 = vld [vmem:[#allocation2 + $0x4] sm:$0xf]
        %v489 = vld [vmem:[#allocation2 + $0x8] sm:$0xf]
        %v490 = vld [vmem:[#allocation2 + $0xc] sm:$0xf]
        %v491 = vld [vmem:[#allocation5] sm:$0x1]
        %v493 = vperm.slane %v491, 0
        %v499 = vunpack.c.l.b16 %v487
        %v500 = vunpack.c.l.b16 %v488
        %v501 = vunpack.c.l.b16 %v489
        %v502 = vunpack.c.l.b16 %v490
        %v503 = vpack.c.b16 %v500, %v499
        %v504 = vpack.c.b16 %v502, %v501
        %vm507 = vcmask 261120
        %v509 = vsel %vm507, %v483, 0
        %v512 = vsel %vm507, %v484, 0
        %v515 = vsel %vm507, %v485, 0
        %v518 = vsel %vm507, %v486, 0
        %520 = vmatpush.bf16.msra.mxu0 0
        %521 = vmatpush.bf16.msra.mxu0 0
        %522 = vmatpush.bf16.msra.mxu0 0
        %523 = vmatpush.bf16.msra.mxu0 0
        %524 = vmatpush.bf16.msra.mxu0 0
        %525 = vmatpush.bf16.msra.mxu0 0
        %526 = vmatpush.bf16.msra.mxu0 %v504
        %527 = vmatpush.bf16.msra.mxu0 %v503
        %528 = vmatmul.bf16.gmra.mxu0 %v509
        %v529 = vpop.f32.mrf.mxu0
        %v530 = vadd.f32 %v493, %v529
        %v531 = vpop.f32.mrf.mxu0
        %v532 = vadd.f32 %v493, %v531
        %533 = vmatmul.bf16.gmra.mxu0 %v512
        %v534 = vpop.f32.mrf.mxu0
        %v535 = vadd.f32 %v493, %v534
        %v536 = vpop.f32.mrf.mxu0
        %v537 = vadd.f32 %v493, %v536
        %538 = vmatmul.bf16.gmra.mxu0 %v515
        %v539 = vpop.f32.mrf.mxu0
        %v540 = vadd.f32 %v493, %v539
        %v541 = vpop.f32.mrf.mxu0
        %v542 = vadd.f32 %v493, %v541
        %543 = vmatmul.bf16.gmra.mxu0 %v518
        %v544 = vpop.f32.mrf.mxu0
        %v545 = vadd.f32 %v493, %v544
        %v546 = vpop.f32.mrf.mxu0
        %v547 = vadd.f32 %v493, %v546
        %548 = vdwg.mxu0
        %v549 = vmax.f32 %v530, 0.0
        %v550 = vmax.f32 %v532, 0.0
        %v551 = vmax.f32 %v535, 0.0
        %v552 = vmax.f32 %v537, 0.0
        %v553 = vmax.f32 %v540, 0.0
        %v554 = vmax.f32 %v542, 0.0
        %v555 = vmax.f32 %v545, 0.0
        %v556 = vmax.f32 %v547, 0.0
        %v557 = vpack.c.bf16 %v550, %v549
        %v558 = vpack.c.bf16 %v552, %v551
        %v559 = vpack.c.bf16 %v554, %v553
        %v560 = vpack.c.bf16 %v556, %v555
        %v561 = vld [vmem:[%s3] sm:$0xf]
        %v562 = vld [vmem:[%s3 + $0x4] sm:$0xf]
        %v563 = vld [vmem:[%s3 + $0x8] sm:$0xf]
        %v564 = vld [vmem:[%s3 + $0xc] sm:$0xf]
        %v565 = vld [vmem:[%s3 + $0x10] sm:$0xf]
        %v566 = vld [vmem:[%s3 + $0x14] sm:$0xf]
        %v567 = vld [vmem:[%s3 + $0x18] sm:$0xf]
        %v568 = vld [vmem:[%s3 + $0x1c] sm:$0xf]
        %v569 = vld [vmem:[%s3 + $0x20] sm:$0xf]
        %v570 = vld [vmem:[%s3 + $0x24] sm:$0xf]
        %v571 = vld [vmem:[%s3 + $0x28] sm:$0xf]
        %v572 = vld [vmem:[%s3 + $0x2c] sm:$0xf]
        %v573 = vld [vmem:[%s3 + $0x30] sm:$0xf]
        %v574 = vld [vmem:[%s3 + $0x34] sm:$0xf]
        %v575 = vld [vmem:[%s3 + $0x38] sm:$0xf]
        %v576 = vld [vmem:[%s3 + $0x3c] sm:$0xf]
        %v577 = vld [vmem:[%s4] sm:$0x1]
        %v579 = vperm.slane %v577, 0
        %v597 = vunpack.c.l.b16 %v561
        %v598 = vunpack.c.l.b16 %v562
        %v599 = vunpack.c.l.b16 %v563
        %v600 = vunpack.c.l.b16 %v564
        %v601 = vunpack.c.l.b16 %v565
        %v602 = vunpack.c.l.b16 %v566
        %v603 = vunpack.c.l.b16 %v567
        %v604 = vunpack.c.l.b16 %v568
        %v605 = vunpack.c.l.b16 %v569
        %v606 = vunpack.c.l.b16 %v570
        %v607 = vunpack.c.l.b16 %v571
        %v608 = vunpack.c.l.b16 %v572
        %v609 = vunpack.c.l.b16 %v573
        %v610 = vunpack.c.l.b16 %v574
        %v611 = vunpack.c.l.b16 %v575
        %v612 = vunpack.c.l.b16 %v576
        %v613 = vpack.c.b16 %v598, %v597
        %v614 = vpack.c.b16 %v600, %v599
        %v615 = vpack.c.b16 %v602, %v601
        %v616 = vpack.c.b16 %v604, %v603
        %v617 = vpack.c.b16 %v606, %v605
        %v618 = vpack.c.b16 %v608, %v607
        %v619 = vpack.c.b16 %v610, %v609
        %v620 = vpack.c.b16 %v612, %v611
        %629 = vmatpush.bf16.msra.mxu0 %v620
        %630 = vmatpush.bf16.msra.mxu0 %v619
        %631 = vmatpush.bf16.msra.mxu0 %v618
        %632 = vmatpush.bf16.msra.mxu0 %v617
        %633 = vmatpush.bf16.msra.mxu0 %v616
        %634 = vmatpush.bf16.msra.mxu0 %v615
        %635 = vmatpush.bf16.msra.mxu0 %v614
        %636 = vmatpush.bf16.msra.mxu0 %v613
        %637 = vmatmul.bf16.gmra.mxu0 %v557
        %v638 = vpop.f32.mrf.mxu0
        %v639 = vadd.f32 %v579, %v638
        %v640 = vpop.f32.mrf.mxu0
        %v641 = vadd.f32 %v579, %v640
        %642 = vmatmul.bf16.gmra.mxu0 %v558
        %v643 = vpop.f32.mrf.mxu0
        %v644 = vadd.f32 %v579, %v643
        %v645 = vpop.f32.mrf.mxu0
        %v646 = vadd.f32 %v579, %v645
        %647 = vmatmul.bf16.gmra.mxu0 %v559
        %v648 = vpop.f32.mrf.mxu0
        %v649 = vadd.f32 %v579, %v648
        %v650 = vpop.f32.mrf.mxu0
        %v651 = vadd.f32 %v579, %v650
        %652 = vmatmul.bf16.gmra.mxu0 %v560
        %v653 = vpop.f32.mrf.mxu0
        %v654 = vadd.f32 %v579, %v653
        %v655 = vpop.f32.mrf.mxu0
        %v656 = vadd.f32 %v579, %v655
        %657 = vdwg.mxu0
        %v658 = vmax.f32 %v639, 0.0
        %v659 = vmax.f32 %v641, 0.0
        %v660 = vmax.f32 %v644, 0.0
        %v661 = vmax.f32 %v646, 0.0
        %v662 = vmax.f32 %v649, 0.0
        %v663 = vmax.f32 %v651, 0.0
        %v664 = vmax.f32 %v654, 0.0
        %v665 = vmax.f32 %v656, 0.0
        %v666 = vpack.c.bf16 %v659, %v658
        %v667 = vpack.c.bf16 %v661, %v660
        %v668 = vpack.c.bf16 %v663, %v662
        %v669 = vpack.c.bf16 %v665, %v664
        %v670 = vld [vmem:[%s5] sm:$0xf]
        %v671 = vld [vmem:[%s5 + $0x4] sm:$0xf]
        %v672 = vld [vmem:[%s5 + $0x8] sm:$0xf]
        %v673 = vld [vmem:[%s5 + $0xc] sm:$0xf]
        %v674 = vld [vmem:[%s5 + $0x10] sm:$0xf]
        %v675 = vld [vmem:[%s5 + $0x14] sm:$0xf]
        %v676 = vld [vmem:[%s5 + $0x18] sm:$0xf]
        %v677 = vld [vmem:[%s5 + $0x1c] sm:$0xf]
        %v678 = vld [vmem:[%s5 + $0x20] sm:$0xf]
        %v679 = vld [vmem:[%s5 + $0x24] sm:$0xf]
        %v680 = vld [vmem:[%s5 + $0x28] sm:$0xf]
        %v681 = vld [vmem:[%s5 + $0x2c] sm:$0xf]
        %v682 = vld [vmem:[%s5 + $0x30] sm:$0xf]
        %v683 = vld [vmem:[%s5 + $0x34] sm:$0xf]
        %v684 = vld [vmem:[%s5 + $0x38] sm:$0xf]
        %v685 = vld [vmem:[%s5 + $0x3c] sm:$0xf]
        %v686 = vld [vmem:[%s6] sm:$0x1]
        %v688 = vperm.slane %v686, 0
        %v706 = vunpack.c.l.b16 %v670
        %v707 = vunpack.c.l.b16 %v671
        %v708 = vunpack.c.l.b16 %v672
        %v709 = vunpack.c.l.b16 %v673
        %v710 = vunpack.c.l.b16 %v674
        %v711 = vunpack.c.l.b16 %v675
        %v712 = vunpack.c.l.b16 %v676
        %v713 = vunpack.c.l.b16 %v677
        %v714 = vunpack.c.l.b16 %v678
        %v715 = vunpack.c.l.b16 %v679
        %v716 = vunpack.c.l.b16 %v680
        %v717 = vunpack.c.l.b16 %v681
        %v718 = vunpack.c.l.b16 %v682
        %v719 = vunpack.c.l.b16 %v683
        %v720 = vunpack.c.l.b16 %v684
        %v721 = vunpack.c.l.b16 %v685
        %v722 = vpack.c.b16 %v707, %v706
        %v723 = vpack.c.b16 %v709, %v708
        %v724 = vpack.c.b16 %v711, %v710
        %v725 = vpack.c.b16 %v713, %v712
        %v726 = vpack.c.b16 %v715, %v714
        %v727 = vpack.c.b16 %v717, %v716
        %v728 = vpack.c.b16 %v719, %v718
        %v729 = vpack.c.b16 %v721, %v720
        %738 = vmatpush.bf16.msra.mxu0 %v729
        %739 = vmatpush.bf16.msra.mxu0 %v728
        %740 = vmatpush.bf16.msra.mxu0 %v727
        %741 = vmatpush.bf16.msra.mxu0 %v726
        %742 = vmatpush.bf16.msra.mxu0 %v725
        %743 = vmatpush.bf16.msra.mxu0 %v724
        %744 = vmatpush.bf16.msra.mxu0 %v723
        %745 = vmatpush.bf16.msra.mxu0 %v722
        %746 = vmatmul.bf16.gmra.mxu0 %v666
        %v747 = vpop.f32.mrf.mxu0
        %v748 = vadd.f32 %v688, %v747
        %v749 = vpop.f32.mrf.mxu0
        %v750 = vadd.f32 %v688, %v749
        %751 = vmatmul.bf16.gmra.mxu0 %v667
        %v752 = vpop.f32.mrf.mxu0
        %v753 = vadd.f32 %v688, %v752
        %v754 = vpop.f32.mrf.mxu0
        %v755 = vadd.f32 %v688, %v754
        %756 = vmatmul.bf16.gmra.mxu0 %v668
        %v757 = vpop.f32.mrf.mxu0
        %v758 = vadd.f32 %v688, %v757
        %v759 = vpop.f32.mrf.mxu0
        %v760 = vadd.f32 %v688, %v759
        %761 = vmatmul.bf16.gmra.mxu0 %v669
        %v762 = vpop.f32.mrf.mxu0
        %v763 = vadd.f32 %v688, %v762
        %v764 = vpop.f32.mrf.mxu0
        %v765 = vadd.f32 %v688, %v764
        %766 = vdwg.mxu0
        %v767 = vadd.f32 %v530, %v748
        %v768 = vadd.f32 %v532, %v750
        %v769 = vadd.f32 %v535, %v753
        %v770 = vadd.f32 %v537, %v755
        %v771 = vadd.f32 %v540, %v758
        %v772 = vadd.f32 %v542, %v760
        %v773 = vadd.f32 %v545, %v763
        %v774 = vadd.f32 %v547, %v765
        %v775 = vmax.f32 %v767, 0.0
        %v776 = vmax.f32 %v768, 0.0
        %v777 = vmax.f32 %v769, 0.0
        %v778 = vmax.f32 %v770, 0.0
        %v779 = vmax.f32 %v771, 0.0
        %v780 = vmax.f32 %v772, 0.0
        %v781 = vmax.f32 %v773, 0.0
        %v782 = vmax.f32 %v774, 0.0
        %v783 = vpack.c.bf16 %v776, %v775
        %v784 = vpack.c.bf16 %v778, %v777
        %v785 = vpack.c.bf16 %v780, %v779
        %v786 = vpack.c.bf16 %v782, %v781
        %v787 = vld [vmem:[%s7] sm:$0xf]
        %v788 = vld [vmem:[%s7 + $0x4] sm:$0xf]
        %v789 = vld [vmem:[%s7 + $0x8] sm:$0xf]
        %v790 = vld [vmem:[%s7 + $0xc] sm:$0xf]
        %v791 = vld [vmem:[%s7 + $0x10] sm:$0xf]
        %v792 = vld [vmem:[%s7 + $0x14] sm:$0xf]
        %v793 = vld [vmem:[%s7 + $0x18] sm:$0xf]
        %v794 = vld [vmem:[%s7 + $0x1c] sm:$0xf]
        %v795 = vld [vmem:[%s7 + $0x20] sm:$0xf]
        %v796 = vld [vmem:[%s7 + $0x24] sm:$0xf]
        %v797 = vld [vmem:[%s7 + $0x28] sm:$0xf]
        %v798 = vld [vmem:[%s7 + $0x2c] sm:$0xf]
        %v799 = vld [vmem:[%s7 + $0x30] sm:$0xf]
        %v800 = vld [vmem:[%s7 + $0x34] sm:$0xf]
        %v801 = vld [vmem:[%s7 + $0x38] sm:$0xf]
        %v802 = vld [vmem:[%s7 + $0x3c] sm:$0xf]
        %v803 = vld [vmem:[%s8] sm:$0x1]
        %v805 = vperm.slane %v803, 0
        %v823 = vunpack.c.l.b16 %v787
        %v824 = vunpack.c.l.b16 %v788
        %v825 = vunpack.c.l.b16 %v789
        %v826 = vunpack.c.l.b16 %v790
        %v827 = vunpack.c.l.b16 %v791
        %v828 = vunpack.c.l.b16 %v792
        %v829 = vunpack.c.l.b16 %v793
        %v830 = vunpack.c.l.b16 %v794
        %v831 = vunpack.c.l.b16 %v795
        %v832 = vunpack.c.l.b16 %v796
        %v833 = vunpack.c.l.b16 %v797
        %v834 = vunpack.c.l.b16 %v798
        %v835 = vunpack.c.l.b16 %v799
        %v836 = vunpack.c.l.b16 %v800
        %v837 = vunpack.c.l.b16 %v801
        %v838 = vunpack.c.l.b16 %v802
        %v839 = vpack.c.b16 %v824, %v823
        %v840 = vpack.c.b16 %v826, %v825
        %v841 = vpack.c.b16 %v828, %v827
        %v842 = vpack.c.b16 %v830, %v829
        %v843 = vpack.c.b16 %v832, %v831
        %v844 = vpack.c.b16 %v834, %v833
        %v845 = vpack.c.b16 %v836, %v835
        %v846 = vpack.c.b16 %v838, %v837
        %855 = vmatpush.bf16.msra.mxu0 %v846
        %856 = vmatpush.bf16.msra.mxu0 %v845
        %857 = vmatpush.bf16.msra.mxu0 %v844
        %858 = vmatpush.bf16.msra.mxu0 %v843
        %859 = vmatpush.bf16.msra.mxu0 %v842
        %860 = vmatpush.bf16.msra.mxu0 %v841
        %861 = vmatpush.bf16.msra.mxu0 %v840
        %862 = vmatpush.bf16.msra.mxu0 %v839
        %863 = vmatmul.bf16.gmra.mxu0 %v783
        %v864 = vpop.f32.mrf.mxu0
        %v865 = vadd.f32 %v805, %v864
        %v866 = vpop.f32.mrf.mxu0
        %v867 = vadd.f32 %v805, %v866
        %868 = vmatmul.bf16.gmra.mxu0 %v784
        %v869 = vpop.f32.mrf.mxu0
        %v870 = vadd.f32 %v805, %v869
        %v871 = vpop.f32.mrf.mxu0
        %v872 = vadd.f32 %v805, %v871
        %873 = vmatmul.bf16.gmra.mxu0 %v785
        %v874 = vpop.f32.mrf.mxu0
        %v875 = vadd.f32 %v805, %v874
        %v876 = vpop.f32.mrf.mxu0
        %v877 = vadd.f32 %v805, %v876
        %878 = vmatmul.bf16.gmra.mxu0 %v786
        %v879 = vpop.f32.mrf.mxu0
        %v880 = vadd.f32 %v805, %v879
        %v881 = vpop.f32.mrf.mxu0
        %v882 = vadd.f32 %v805, %v881
        %883 = vdwg.mxu0
        %v884 = vmax.f32 %v865, 0.0
        %v885 = vmax.f32 %v867, 0.0
        %v886 = vmax.f32 %v870, 0.0
        %v887 = vmax.f32 %v872, 0.0
        %v888 = vmax.f32 %v875, 0.0
        %v889 = vmax.f32 %v877, 0.0
        %v890 = vmax.f32 %v880, 0.0
        %v891 = vmax.f32 %v882, 0.0
        %v892 = vpack.c.bf16 %v885, %v884
        %v893 = vpack.c.bf16 %v887, %v886
        %v894 = vpack.c.bf16 %v889, %v888
        %v895 = vpack.c.bf16 %v891, %v890
        %v896 = vld [vmem:[%s9] sm:$0xf]
        %v897 = vld [vmem:[%s9 + $0x4] sm:$0xf]
        %v898 = vld [vmem:[%s9 + $0x8] sm:$0xf]
        %v899 = vld [vmem:[%s9 + $0xc] sm:$0xf]
        %v900 = vld [vmem:[%s9 + $0x10] sm:$0xf]
        %v901 = vld [vmem:[%s9 + $0x14] sm:$0xf]
        %v902 = vld [vmem:[%s9 + $0x18] sm:$0xf]
        %v903 = vld [vmem:[%s9 + $0x1c] sm:$0xf]
        %v904 = vld [vmem:[%s9 + $0x20] sm:$0xf]
        %v905 = vld [vmem:[%s9 + $0x24] sm:$0xf]
        %v906 = vld [vmem:[%s9 + $0x28] sm:$0xf]
        %v907 = vld [vmem:[%s9 + $0x2c] sm:$0xf]
        %v908 = vld [vmem:[%s9 + $0x30] sm:$0xf]
        %v909 = vld [vmem:[%s9 + $0x34] sm:$0xf]
        %v910 = vld [vmem:[%s9 + $0x38] sm:$0xf]
        %v911 = vld [vmem:[%s9 + $0x3c] sm:$0xf]
        %v912 = vld [vmem:[%s10] sm:$0x1]
        %v914 = vperm.slane %v912, 0
        %v932 = vunpack.c.l.b16 %v896
        %v933 = vunpack.c.l.b16 %v897
        %v934 = vunpack.c.l.b16 %v898
        %v935 = vunpack.c.l.b16 %v899
        %v936 = vunpack.c.l.b16 %v900
        %v937 = vunpack.c.l.b16 %v901
        %v938 = vunpack.c.l.b16 %v902
        %v939 = vunpack.c.l.b16 %v903
        %v940 = vunpack.c.l.b16 %v904
        %v941 = vunpack.c.l.b16 %v905
        %v942 = vunpack.c.l.b16 %v906
        %v943 = vunpack.c.l.b16 %v907
        %v944 = vunpack.c.l.b16 %v908
        %v945 = vunpack.c.l.b16 %v909
        %v946 = vunpack.c.l.b16 %v910
        %v947 = vunpack.c.l.b16 %v911
        %v948 = vpack.c.b16 %v933, %v932
        %v949 = vpack.c.b16 %v935, %v934
        %v950 = vpack.c.b16 %v937, %v936
        %v951 = vpack.c.b16 %v939, %v938
        %v952 = vpack.c.b16 %v941, %v940
        %v953 = vpack.c.b16 %v943, %v942
        %v954 = vpack.c.b16 %v945, %v944
        %v955 = vpack.c.b16 %v947, %v946
        %964 = vmatpush.bf16.msra.mxu0 %v955
        %965 = vmatpush.bf16.msra.mxu0 %v954
        %966 = vmatpush.bf16.msra.mxu0 %v953
        %967 = vmatpush.bf16.msra.mxu0 %v952
        %968 = vmatpush.bf16.msra.mxu0 %v951
        %969 = vmatpush.bf16.msra.mxu0 %v950
        %970 = vmatpush.bf16.msra.mxu0 %v949
        %971 = vmatpush.bf16.msra.mxu0 %v948
        %972 = vmatmul.bf16.gmra.mxu0 %v892
        %v973 = vpop.f32.mrf.mxu0
        %v974 = vadd.f32 %v914, %v973
        %v975 = vpop.f32.mrf.mxu0
        %v976 = vadd.f32 %v914, %v975
        %977 = vmatmul.bf16.gmra.mxu0 %v893
        %v978 = vpop.f32.mrf.mxu0
        %v979 = vadd.f32 %v914, %v978
        %v980 = vpop.f32.mrf.mxu0
        %v981 = vadd.f32 %v914, %v980
        %982 = vmatmul.bf16.gmra.mxu0 %v894
        %v983 = vpop.f32.mrf.mxu0
        %v984 = vadd.f32 %v914, %v983
        %v985 = vpop.f32.mrf.mxu0
        %v986 = vadd.f32 %v914, %v985
        %987 = vmatmul.bf16.gmra.mxu0 %v895
        %v988 = vpop.f32.mrf.mxu0
        %v989 = vadd.f32 %v914, %v988
        %v990 = vpop.f32.mrf.mxu0
        %v991 = vadd.f32 %v914, %v990
        %992 = vdwg.mxu0
        %v993 = vadd.f32 %v767, %v974
        %v994 = vadd.f32 %v768, %v976
        %v995 = vadd.f32 %v769, %v979
        %v996 = vadd.f32 %v770, %v981
        %v997 = vadd.f32 %v771, %v984
        %v998 = vadd.f32 %v772, %v986
        %v999 = vadd.f32 %v773, %v989
        %v1000 = vadd.f32 %v774, %v991
        %v1001 = vmax.f32 %v993, 0.0
        %v1002 = vmax.f32 %v994, 0.0
        %v1003 = vmax.f32 %v995, 0.0
        %v1004 = vmax.f32 %v996, 0.0
        %v1005 = vmax.f32 %v997, 0.0
        %v1006 = vmax.f32 %v998, 0.0
        %v1007 = vmax.f32 %v999, 0.0
        %v1008 = vmax.f32 %v1000, 0.0
        %v1009 = vpack.c.bf16 %v1002, %v1001
        %v1010 = vpack.c.bf16 %v1004, %v1003
        %v1011 = vpack.c.bf16 %v1006, %v1005
        %v1012 = vpack.c.bf16 %v1008, %v1007
        %v1013 = vld [vmem:[%s11] sm:$0xf]
        %v1014 = vld [vmem:[%s11 + $0x4] sm:$0xf]
        %v1015 = vld [vmem:[%s11 + $0x8] sm:$0xf]
        %v1016 = vld [vmem:[%s11 + $0xc] sm:$0xf]
        %v1017 = vld [vmem:[%s11 + $0x10] sm:$0xf]
        %v1018 = vld [vmem:[%s11 + $0x14] sm:$0xf]
        %v1019 = vld [vmem:[%s11 + $0x18] sm:$0xf]
        %v1020 = vld [vmem:[%s11 + $0x1c] sm:$0xf]
        %v1021 = vld [vmem:[%s11 + $0x20] sm:$0xf]
        %v1022 = vld [vmem:[%s11 + $0x24] sm:$0xf]
        %v1023 = vld [vmem:[%s11 + $0x28] sm:$0xf]
        %v1024 = vld [vmem:[%s11 + $0x2c] sm:$0xf]
        %v1025 = vld [vmem:[%s11 + $0x30] sm:$0xf]
        %v1026 = vld [vmem:[%s11 + $0x34] sm:$0xf]
        %v1027 = vld [vmem:[%s11 + $0x38] sm:$0xf]
        %v1028 = vld [vmem:[%s11 + $0x3c] sm:$0xf]
        %v1029 = vld [vmem:[%s12] sm:$0x1]
        %v1031 = vperm.slane %v1029, 0
        %v1049 = vunpack.c.l.b16 %v1013
        %v1050 = vunpack.c.l.b16 %v1014
        %v1051 = vunpack.c.l.b16 %v1015
        %v1052 = vunpack.c.l.b16 %v1016
        %v1053 = vunpack.c.l.b16 %v1017
        %v1054 = vunpack.c.l.b16 %v1018
        %v1055 = vunpack.c.l.b16 %v1019
        %v1056 = vunpack.c.l.b16 %v1020
        %v1057 = vunpack.c.l.b16 %v1021
        %v1058 = vunpack.c.l.b16 %v1022
        %v1059 = vunpack.c.l.b16 %v1023
        %v1060 = vunpack.c.l.b16 %v1024
        %v1061 = vunpack.c.l.b16 %v1025
        %v1062 = vunpack.c.l.b16 %v1026
        %v1063 = vunpack.c.l.b16 %v1027
        %v1064 = vunpack.c.l.b16 %v1028
        %v1065 = vpack.c.b16 %v1050, %v1049
        %v1066 = vpack.c.b16 %v1052, %v1051
        %v1067 = vpack.c.b16 %v1054, %v1053
        %v1068 = vpack.c.b16 %v1056, %v1055
        %v1069 = vpack.c.b16 %v1058, %v1057
        %v1070 = vpack.c.b16 %v1060, %v1059
        %v1071 = vpack.c.b16 %v1062, %v1061
        %v1072 = vpack.c.b16 %v1064, %v1063
        %1081 = vmatpush.bf16.msra.mxu0 %v1072
        %1082 = vmatpush.bf16.msra.mxu0 %v1071
        %1083 = vmatpush.bf16.msra.mxu0 %v1070
        %1084 = vmatpush.bf16.msra.mxu0 %v1069
        %1085 = vmatpush.bf16.msra.mxu0 %v1068
        %1086 = vmatpush.bf16.msra.mxu0 %v1067
        %1087 = vmatpush.bf16.msra.mxu0 %v1066
        %1088 = vmatpush.bf16.msra.mxu0 %v1065
        %1089 = vmatmul.bf16.gmra.mxu0 %v1009
        %v1090 = vpop.f32.mrf.mxu0
        %v1091 = vadd.f32 %v1031, %v1090
        %v1092 = vpop.f32.mrf.mxu0
        %v1093 = vadd.f32 %v1031, %v1092
        %1094 = vmatmul.bf16.gmra.mxu0 %v1010
        %v1095 = vpop.f32.mrf.mxu0
        %v1096 = vadd.f32 %v1031, %v1095
        %v1097 = vpop.f32.mrf.mxu0
        %v1098 = vadd.f32 %v1031, %v1097
        %1099 = vmatmul.bf16.gmra.mxu0 %v1011
        %v1100 = vpop.f32.mrf.mxu0
        %v1101 = vadd.f32 %v1031, %v1100
        %v1102 = vpop.f32.mrf.mxu0
        %v1103 = vadd.f32 %v1031, %v1102
        %1104 = vmatmul.bf16.gmra.mxu0 %v1012
        %v1105 = vpop.f32.mrf.mxu0
        %v1106 = vadd.f32 %v1031, %v1105
        %v1107 = vpop.f32.mrf.mxu0
        %v1108 = vadd.f32 %v1031, %v1107
        %1109 = vdwg.mxu0
        %v1110 = vxor.u32 %v1091, 2147483648
        %v1111 = vxor.u32 %v1093, 2147483648
        %v1112 = vxor.u32 %v1096, 2147483648
        %v1113 = vxor.u32 %v1098, 2147483648
        %v1114 = vxor.u32 %v1101, 2147483648
        %v1115 = vxor.u32 %v1103, 2147483648
        %v1116 = vxor.u32 %v1106, 2147483648
        %v1117 = vxor.u32 %v1108, 2147483648
        %v1118 = vmul.f32 %v1110, 1.442695
        %v1119 = vpow.pop %v1118
        %v1120 = vmul.f32 %v1111, 1.442695
        %v1121 = vpow.pop %v1120
        %v1122 = vmul.f32 %v1112, 1.442695
        %v1123 = vpow.pop %v1122
        %v1124 = vmul.f32 %v1113, 1.442695
        %v1125 = vpow.pop %v1124
        %v1126 = vmul.f32 %v1114, 1.442695
        %v1127 = vpow.pop %v1126
        %v1128 = vmul.f32 %v1115, 1.442695
        %v1129 = vpow.pop %v1128
        %v1130 = vmul.f32 %v1116, 1.442695
        %v1131 = vpow.pop %v1130
        %v1132 = vmul.f32 %v1117, 1.442695
        %v1133 = vpow.pop %v1132
        %v1134 = vadd.f32 %v1119, 1.0
        %v1135 = vadd.f32 %v1121, 1.0
        %v1136 = vadd.f32 %v1123, 1.0
        %v1137 = vadd.f32 %v1125, 1.0
        %v1138 = vadd.f32 %v1127, 1.0
        %v1139 = vadd.f32 %v1129, 1.0
        %v1140 = vadd.f32 %v1131, 1.0
        %v1141 = vadd.f32 %v1133, 1.0
        %v1142 = vrcp.pop %v1134
        %v1143 = vmul.f32 %v1134, %v1142
        %v1144 = vsub.f32 1.0, %v1143
        %v1145 = vmul.f32 %v1142, %v1144
        %v1146 = vadd.f32 %v1142, %v1145
        %vm1147 = vweird.f32 %v1134
        %vm1148 = vweird.f32 %v1142
        %vm1149 = vmor %vm1147, %vm1148
        %v1150 = vsel %vm1149, %v1142, %v1146
        %v1151 = vand.u32 2147483647, %v1134
        %vm1152 = vcmp.eq.f32.partialorder %v1151, 8.507059e+37
        %v1153 = vand.u32 %v1134, 2147483648
        %v1154 = vor.u32 1.1754944e-38, %v1153
        %v1155 = vsel %vm1152, %v1154, %v1150
        %v1156 = vmul.f32 1.0, %v1155
        %v1157 = vrcp.pop %v1135
        %v1158 = vmul.f32 %v1135, %v1157
        %v1159 = vsub.f32 1.0, %v1158
        %v1160 = vmul.f32 %v1157, %v1159
        %v1161 = vadd.f32 %v1157, %v1160
        %vm1162 = vweird.f32 %v1135
        %vm1163 = vweird.f32 %v1157
        %vm1164 = vmor %vm1162, %vm1163
        %v1165 = vsel %vm1164, %v1157, %v1161
        %v1166 = vand.u32 2147483647, %v1135
        %vm1167 = vcmp.eq.f32.partialorder %v1166, 8.507059e+37
        %v1168 = vand.u32 %v1135, 2147483648
        %v1169 = vor.u32 1.1754944e-38, %v1168
        %v1170 = vsel %vm1167, %v1169, %v1165
        %v1171 = vmul.f32 1.0, %v1170
        %v1172 = vrcp.pop %v1136
        %v1173 = vmul.f32 %v1136, %v1172
        %v1174 = vsub.f32 1.0, %v1173
        %v1175 = vmul.f32 %v1172, %v1174
        %v1176 = vadd.f32 %v1172, %v1175
        %vm1177 = vweird.f32 %v1136
        %vm1178 = vweird.f32 %v1172
        %vm1179 = vmor %vm1177, %vm1178
        %v1180 = vsel %vm1179, %v1172, %v1176
        %v1181 = vand.u32 2147483647, %v1136
        %vm1182 = vcmp.eq.f32.partialorder %v1181, 8.507059e+37
        %v1183 = vand.u32 %v1136, 2147483648
        %v1184 = vor.u32 1.1754944e-38, %v1183
        %v1185 = vsel %vm1182, %v1184, %v1180
        %v1186 = vmul.f32 1.0, %v1185
        %v1187 = vrcp.pop %v1137
        %v1188 = vmul.f32 %v1137, %v1187
        %v1189 = vsub.f32 1.0, %v1188
        %v1190 = vmul.f32 %v1187, %v1189
        %v1191 = vadd.f32 %v1187, %v1190
        %vm1192 = vweird.f32 %v1137
        %vm1193 = vweird.f32 %v1187
        %vm1194 = vmor %vm1192, %vm1193
        %v1195 = vsel %vm1194, %v1187, %v1191
        %v1196 = vand.u32 2147483647, %v1137
        %vm1197 = vcmp.eq.f32.partialorder %v1196, 8.507059e+37
        %v1198 = vand.u32 %v1137, 2147483648
        %v1199 = vor.u32 1.1754944e-38, %v1198
        %v1200 = vsel %vm1197, %v1199, %v1195
        %v1201 = vmul.f32 1.0, %v1200
        %v1202 = vrcp.pop %v1138
        %v1203 = vmul.f32 %v1138, %v1202
        %v1204 = vsub.f32 1.0, %v1203
        %v1205 = vmul.f32 %v1202, %v1204
        %v1206 = vadd.f32 %v1202, %v1205
        %vm1207 = vweird.f32 %v1138
        %vm1208 = vweird.f32 %v1202
        %vm1209 = vmor %vm1207, %vm1208
        %v1210 = vsel %vm1209, %v1202, %v1206
        %v1211 = vand.u32 2147483647, %v1138
        %vm1212 = vcmp.eq.f32.partialorder %v1211, 8.507059e+37
        %v1213 = vand.u32 %v1138, 2147483648
        %v1214 = vor.u32 1.1754944e-38, %v1213
        %v1215 = vsel %vm1212, %v1214, %v1210
        %v1216 = vmul.f32 1.0, %v1215
        %v1217 = vrcp.pop %v1139
        %v1218 = vmul.f32 %v1139, %v1217
        %v1219 = vsub.f32 1.0, %v1218
        %v1220 = vmul.f32 %v1217, %v1219
        %v1221 = vadd.f32 %v1217, %v1220
        %vm1222 = vweird.f32 %v1139
        %vm1223 = vweird.f32 %v1217
        %vm1224 = vmor %vm1222, %vm1223
        %v1225 = vsel %vm1224, %v1217, %v1221
        %v1226 = vand.u32 2147483647, %v1139
        %vm1227 = vcmp.eq.f32.partialorder %v1226, 8.507059e+37
        %v1228 = vand.u32 %v1139, 2147483648
        %v1229 = vor.u32 1.1754944e-38, %v1228
        %v1230 = vsel %vm1227, %v1229, %v1225
        %v1231 = vmul.f32 1.0, %v1230
        %v1232 = vrcp.pop %v1140
        %v1233 = vmul.f32 %v1140, %v1232
        %v1234 = vsub.f32 1.0, %v1233
        %v1235 = vmul.f32 %v1232, %v1234
        %v1236 = vadd.f32 %v1232, %v1235
        %vm1237 = vweird.f32 %v1140
        %vm1238 = vweird.f32 %v1232
        %vm1239 = vmor %vm1237, %vm1238
        %v1240 = vsel %vm1239, %v1232, %v1236
        %v1241 = vand.u32 2147483647, %v1140
        %vm1242 = vcmp.eq.f32.partialorder %v1241, 8.507059e+37
        %v1243 = vand.u32 %v1140, 2147483648
        %v1244 = vor.u32 1.1754944e-38, %v1243
        %v1245 = vsel %vm1242, %v1244, %v1240
        %v1246 = vmul.f32 1.0, %v1245
        %v1247 = vrcp.pop %v1141
        %v1248 = vmul.f32 %v1141, %v1247
        %v1249 = vsub.f32 1.0, %v1248
        %v1250 = vmul.f32 %v1247, %v1249
        %v1251 = vadd.f32 %v1247, %v1250
        %vm1252 = vweird.f32 %v1141
        %vm1253 = vweird.f32 %v1247
        %vm1254 = vmor %vm1252, %vm1253
        %v1255 = vsel %vm1254, %v1247, %v1251
        %v1256 = vand.u32 2147483647, %v1141
        %vm1257 = vcmp.eq.f32.partialorder %v1256, 8.507059e+37
        %v1258 = vand.u32 %v1141, 2147483648
        %v1259 = vor.u32 1.1754944e-38, %v1258
        %v1260 = vsel %vm1257, %v1259, %v1255
        %v1261 = vmul.f32 1.0, %v1260
        %1262 = vst [vmem:[%s466] sm:$0xff] %v1156
        %1263 = vst [vmem:[%s466 + $0x8] sm:$0xff] %v1171
        %1264 = vst [vmem:[%s466 + $0x10] sm:$0xff] %v1186
        %1265 = vst [vmem:[%s466 + $0x18] sm:$0xff] %v1201
        %1266 = vst [vmem:[%s466 + $0x20] sm:$0xff] %v1216
        %1267 = vst [vmem:[%s466 + $0x28] sm:$0xff] %v1231
        %1268 = vst [vmem:[%s466 + $0x30] sm:$0xff] %v1246
        %1269 = vst [vmem:[%s466 + $0x38] sm:$0xff] %v1261
        %s1270 = sand.u32 %s315, 1
        %s1271 = scalar_lea.sflag [#allocation4], %s1270
        %s1272 = sand.u32 %s315, 1
        %s1273 = smul.addr %s1272, 64
        %s1274 = scalar_lea.vmem [#allocation7], %s1273
        // Predicated region
        $region81: #{tpu_custom_call.1} parent=71 // pred_check
          %p1275 = pneg %p325
        $region82: #{tpu_custom_call.1} parent=71 // pred_check_branch
          %1277 = sbr.rel (%p1275) target = $region84
        $region83: #{tpu_custom_call.1} parent=71 // pred_region
          %s1278 = smul.u32 8, %s29
          %1280 = vsyncadd %s1271, 0
          %s1281 = smul.addr %s1278, 8
          %s1282 = scalar_lea.hbm %s13, %s1281
          %s1283 = sshll.u32 %s1274, 4
          %s1284 = int_to_ptr.vmem [resolvable:$true] %s1283
          %s1285 = sshll.u32 %s1282, 4
          %s1286 = int_to_ptr.hbm [resolvable:$true] %s1285
          %1291 = dma.vmem_to_hbm [thread:$0]  %s1284, 1024, %s1286, %s1271, 128, 128, 8
        $region84: #{tpu_custom_call.1} parent=71 // pred_fallthru
          _
      $region72: #{tpu_custom_call.1} parent=5 // pred_fallthru
        _
      %p1292 = scmp.le.s32.totalorder 2, %s24
      // Predicated region
      $region85: #{tpu_custom_call.1} parent=5 // pred_check
        %p1293 = pneg %p1292
      $region86: #{tpu_custom_call.1} parent=5 // pred_check_branch
        %1295 = sbr.rel (%p1293) target = $region88
      $region87: #{tpu_custom_call.1} parent=5 // pred_region
        %s1296 = ssub.s32 %s24, 2
        // Predicated region
        $region89: #{tpu_custom_call.1} parent=87 // pred_check
          %p1297 = pneg %p331
        $region90: #{tpu_custom_call.1} parent=87 // pred_check_branch
          %1299 = sbr.rel (%p1297) target = $region92
        $region91: #{tpu_custom_call.1} parent=87 // pred_region
          %s1300 = sand.u32 %s316, 1
          %s1301 = scalar_lea.sflag [#allocation4], %s1300
          %s1302 = sand.u32 %s316, 1
          %s1303 = smul.addr %s1302, 64
          %s1304 = scalar_lea.vmem [#allocation7], %s1303
          %1306 = dma.done %s1301, 1024
        $region92: #{tpu_custom_call.1} parent=87 // pred_fallthru
          _
      $region88: #{tpu_custom_call.1} parent=5 // pred_fallthru
        _
    $region6: #{tpu_custom_call.1} parent=1 // loop_footer
      %s28 = sadd.s32 1, %s24
    $region7: #{tpu_custom_call.1} parent=1 // loop_footer_branch
      %23 = sbr.rel target = $region3
    $region8: #{tpu_custom_call.1} parent=1 // loop_exit
      _
    %1307 = vsyncpa [#allocation3], 1
    %s1308 = scalar_lea.sflag [#allocation3], 1
    %1309 = vsyncpa %s1308, 1
    %1310 = vsyncpa [#allocation6], 1
    %1311 = vsyncpa [#allocation4], 1
    %s1312 = scalar_lea.sflag [#allocation4], 1
    %1313 = vsyncpa %s1312, 1

// kernel: tpu_custom_call.1
$region0: #{tpu_custom_call.1}
  #allocation0 [shape = 'u32[]', space=smem, size = 0x4, offset = 0x4, fixed_abs, tag = 'smem constant byte address 0x4 - core index']
  #allocation1 [shape = 'u32[72,128]{1,0:T(1,128)}', space=vmem, size = 0x9000, scoped, tag = 'internal scratch']
  %s0 = inlined_call_operand.vmem [shape: f32[256,32], index: 0, kind: input, shape index: {}]
  %s1 = inlined_call_operand.hbm [shape: bf16[32,128], index: 1, kind: input, shape index: {}]
  %s2 = inlined_call_operand.hbm [shape: f32[1,128], index: 2, kind: input, shape index: {}]
  %s3 = inlined_call_operand.vmem [shape: bf16[128,128], index: 3, kind: input, shape index: {}]
  %s4 = inlined_call_operand.vmem [shape: f32[1,128], index: 4, kind: input, shape index: {}]
  %s5 = inlined_call_operand.vmem [shape: bf16[128,128], index: 5, kind: input, shape index: {}]
  %s6 = inlined_call_operand.vmem [shape: f32[1,128], index: 6, kind: input, shape index: {}]
  %s7 = inlined_call_operand.vmem [shape: bf16[128,128], index: 7, kind: input, shape index: {}]
  %s8 = inlined_call_operand.vmem [shape: f32[1,128], index: 8, kind: input, shape index: {}]
  %s9 = inlined_call_operand.vmem [shape: bf16[128,128], index: 9, kind: input, shape index: {}]
  %s10 = inlined_call_operand.vmem [shape: f32[1,128], index: 10, kind: input, shape index: {}]
  %s11 = inlined_call_operand.vmem [shape: bf16[128,128], index: 11, kind: input, shape index: {}]
  %s12 = inlined_call_operand.vmem [shape: f32[1,128], index: 12, kind: input, shape index: {}]
  %s13 = inlined_call_operand.hbm [shape: f32[256,128], index: 13, kind: output, shape index: {}]
  %s14 = sld [smem:[#allocation0]]
  $region93: #{tpu_custom_call.1} parent=0
    _
  %s16 = ssub.s32 1, %s14
  %s17 = scalar_select 0, %s16, %s14
  $region1: #{tpu_custom_call.1} parent=0
    #allocation2 [shape = 'u8[8192]{0}', space=vmem, size = 0x2000, scoped, tag = 'input window, operand 1, single buffered']
    #allocation3 [shape = 's32[2]{0}', space=sflag, size = 0x8, scoped, tag = 'scoped memory for tpu_custom_call.1']
    #allocation4 [shape = 's32[2]{0}', space=sflag, size = 0x8, scoped, tag = 'scoped memory for tpu_custom_call.1']
    #allocation5 [shape = 'u8[512]{0}', space=vmem, size = 0x400, scoped, tag = 'input window, operand 2, single buffered']
    #allocation6 [shape = 's32[1]{0}', space=sflag, size = 0x4, scoped, tag = 'scoped memory for tpu_custom_call.1']
    #allocation7 [shape = 'u8[65536]{0}', space=vmem, size = 0x10000, scoped, tag = 'output window, operand 0']
    %18 = vsyncpa [#allocation3], 0
    %19 = vsyncpa [#allocation6], 0
    %20 = vsyncpa [#allocation4], 0
    %s21 = scalar_lea.sflag [#allocation4], 1
    %22 = vsyncpa %s21, 0
    loop: start=0, step=1, limit=6
    $region2: #{tpu_custom_call.1} parent=1 // loop_pre_header
      _
    $region3: #{tpu_custom_call.1} parent=1 // loop_header
      %s24 = sphi 0, %s28
      %p25 = scmp.ge.s32.totalorder %s24, 6
      %s34 = sphi 0, %s36
      %s37 = sphi 0, %s34
      %s38 = sphi 0, %s37
      %s54 = sphi 0, %s38
      %s58 = sphi 0, %s58
      %s60 = sphi 0, %s58
      %s61 = sphi 0, %s60
      %s75 = sphi 0, %s61
      %s79 = sphi 0, %s79
      %s81 = sphi 0, %s79
      %s82 = sphi 0, %s81
      %s96 = sphi 0, %s82
      %s100 = sphi 0, %s100
      %s102 = sphi 0, %s100
      %s103 = sphi 0, %s102
      %s117 = sphi 0, %s103
      %s121 = sphi 0, %s121
      %s123 = sphi 0, %s121
      %s124 = sphi 0, %s123
      %s138 = sphi 0, %s124
      %s142 = sphi 0, %s142
      %s144 = sphi 0, %s142
      %s145 = sphi 0, %s144
      %s159 = sphi 0, %s145
      %s163 = sphi 0, %s163
      %s165 = sphi 0, %s163
      %s166 = sphi 0, %s165
      %s180 = sphi 0, %s166
      %s184 = sphi 0, %s184
      %s186 = sphi 0, %s184
      %s187 = sphi 0, %s186
      %s201 = sphi 0, %s187
      %s205 = sphi 0, %s205
      %s207 = sphi 0, %s205
      %s208 = sphi 0, %s207
      %s222 = sphi 0, %s208
      %s226 = sphi 0, %s226
      %s228 = sphi 0, %s226
      %s229 = sphi 0, %s228
      %s243 = sphi 0, %s229
      %s247 = sphi 0, %s247
      %s249 = sphi 0, %s247
      %s250 = sphi 0, %s249
      %s264 = sphi 0, %s250
      %s268 = sphi 0, %s268
      %s270 = sphi 0, %s268
      %s271 = sphi 0, %s270
      %s285 = sphi 0, %s271
      %s289 = sphi 0, %s289
      %s291 = sphi 0, %s289
      %s292 = sphi 0, %s291
      %s306 = sphi 0, %s292
      %s312 = sphi 0, %s314
      %s315 = sphi 0, %s312
      %s316 = sphi 0, %s315
      %s332 = sphi 0, %s316
    $region4: #{tpu_custom_call.1} parent=1 // loop_header_branch
      %27 = sbr.rel (%p25) target = $region8
    $region5: #{tpu_custom_call.1} parent=1 // loop_body
      %s29 = ssub.s32 %s24, 1
      %s30 = ssub.s32 %s24, 2
      %s31 = sadd.s32 %s24, 1
      %s32 = ssub.s32 %s24, %s31
      %p33 = scmp.eq.s32.totalorder %s32, 0
      %s35 = sadd.s32 %s34, 1
      %s36 = scalar_select %p33, %s34, %s35
      %p39 = pneg %p33
      %p40 = scmp.eq.s32.totalorder %s24, 3
      %p41 = por %p39, %p40
      %p42 = scmp.ne.s32.totalorder %s34, %s37
      %p43 = scmp.eq.s32.totalorder %s24, 0
      %p44 = por %p42, %p43
      %p45 = scmp.ne.s32.totalorder %s34, %s37
      %p46 = scmp.eq.s32.totalorder %s29, 3
      %p47 = por %p45, %p46
      %p48 = scmp.ne.s32.totalorder %s37, %s38
      %p49 = scmp.eq.s32.totalorder %s29, 0
      %p50 = por %p48, %p49
      %p51 = scmp.ne.s32.totalorder %s37, %s38
      %p52 = scmp.eq.s32.totalorder %s30, 3
      %p53 = por %p51, %p52
      %p55 = scmp.ne.s32.totalorder %s38, %s54
      %p56 = scmp.eq.s32.totalorder %s30, 0
      %p57 = por %p55, %p56
      %s59 = sadd.s32 %s58, 1
      %p62 = scmp.eq.s32.totalorder %s24, 3
      %p63 = scmp.ne.s32.totalorder %s58, %s60
      %p64 = scmp.eq.s32.totalorder %s24, 0
      %p65 = por %p63, %p64
      %p66 = scmp.ne.s32.totalorder %s58, %s60
      %p67 = scmp.eq.s32.totalorder %s29, 3
      %p68 = por %p66, %p67
      %p69 = scmp.ne.s32.totalorder %s60, %s61
      %p70 = scmp.eq.s32.totalorder %s29, 0
      %p71 = por %p69, %p70
      %p72 = scmp.ne.s32.totalorder %s60, %s61
      %p73 = scmp.eq.s32.totalorder %s30, 3
      %p74 = por %p72, %p73
      %p76 = scmp.ne.s32.totalorder %s61, %s75
      %p77 = scmp.eq.s32.totalorder %s30, 0
      %p78 = por %p76, %p77
      %s80 = sadd.s32 %s79, 1
      %p83 = scmp.eq.s32.totalorder %s24, 3
      %p84 = scmp.ne.s32.totalorder %s79, %s81
      %p85 = scmp.eq.s32.totalorder %s24, 0
      %p86 = por %p84, %p85
      %p87 = scmp.ne.s32.totalorder %s79, %s81
      %p88 = scmp.eq.s32.totalorder %s29, 3
      %p89 = por %p87, %p88
      %p90 = scmp.ne.s32.totalorder %s81, %s82
      %p91 = scmp.eq.s32.totalorder %s29, 0
      %p92 = por %p90, %p91
      %p93 = scmp.ne.s32.totalorder %s81, %s82
      %p94 = scmp.eq.s32.totalorder %s30, 3
      %p95 = por %p93, %p94
      %p97 = scmp.ne.s32.totalorder %s82, %s96
      %p98 = scmp.eq.s32.totalorder %s30, 0
      %p99 = por %p97, %p98
      %s101 = sadd.s32 %s100, 1
      %p104 = scmp.eq.s32.totalorder %s24, 3
      %p105 = scmp.ne.s32.totalorder %s100, %s102
      %p106 = scmp.eq.s32.totalorder %s24, 0
      %p107 = por %p105, %p106
      %p108 = scmp.ne.s32.totalorder %s100, %s102
      %p109 = scmp.eq.s32.totalorder %s29, 3
      %p110 = por %p108, %p109
      %p111 = scmp.ne.s32.totalorder %s102, %s103
      %p112 = scmp.eq.s32.totalorder %s29, 0
      %p113 = por %p111, %p112
      %p114 = scmp.ne.s32.totalorder %s102, %s103
      %p115 = scmp.eq.s32.totalorder %s30, 3
      %p116 = por %p114, %p115
      %p118 = scmp.ne.s32.totalorder %s103, %s117
      %p119 = scmp.eq.s32.totalorder %s30, 0
      %p120 = por %p118, %p119
      %s122 = sadd.s32 %s121, 1
      %p125 = scmp.eq.s32.totalorder %s24, 3
      %p126 = scmp.ne.s32.totalorder %s121, %s123
      %p127 = scmp.eq.s32.totalorder %s24, 0
      %p128 = por %p126, %p127
      %p129 = scmp.ne.s32.totalorder %s121, %s123
      %p130 = scmp.eq.s32.totalorder %s29, 3
      %p131 = por %p129, %p130
      %p132 = scmp.ne.s32.totalorder %s123, %s124
      %p133 = scmp.eq.s32.totalorder %s29, 0
      %p134 = por %p132, %p133
      %p135 = scmp.ne.s32.totalorder %s123, %s124
      %p136 = scmp.eq.s32.totalorder %s30, 3
      %p137 = por %p135, %p136
      %p139 = scmp.ne.s32.totalorder %s124, %s138
      %p140 = scmp.eq.s32.totalorder %s30, 0
      %p141 = por %p139, %p140
      %s143 = sadd.s32 %s142, 1
      %p146 = scmp.eq.s32.totalorder %s24, 3
      %p147 = scmp.ne.s32.totalorder %s142, %s144
      %p148 = scmp.eq.s32.totalorder %s24, 0
      %p149 = por %p147, %p148
      %p150 = scmp.ne.s32.totalorder %s142, %s144
      %p151 = scmp.eq.s32.totalorder %s29, 3
      %p152 = por %p150, %p151
      %p153 = scmp.ne.s32.totalorder %s144, %s145
      %p154 = scmp.eq.s32.totalorder %s29, 0
      %p155 = por %p153, %p154
      %p156 = scmp.ne.s32.totalorder %s144, %s145
      %p157 = scmp.eq.s32.totalorder %s30, 3
      %p158 = por %p156, %p157
      %p160 = scmp.ne.s32.totalorder %s145, %s159
      %p161 = scmp.eq.s32.totalorder %s30, 0
      %p162 = por %p160, %p161
      %s164 = sadd.s32 %s163, 1
      %p167 = scmp.eq.s32.totalorder %s24, 3
      %p168 = scmp.ne.s32.totalorder %s163, %s165
      %p169 = scmp.eq.s32.totalorder %s24, 0
      %p170 = por %p168, %p169
      %p171 = scmp.ne.s32.totalorder %s163, %s165
      %p172 = scmp.eq.s32.totalorder %s29, 3
      %p173 = por %p171, %p172
      %p174 = scmp.ne.s32.totalorder %s165, %s166
      %p175 = scmp.eq.s32.totalorder %s29, 0
      %p176 = por %p174, %p175
      %p177 = scmp.ne.s32.totalorder %s165, %s166
      %p178 = scmp.eq.s32.totalorder %s30, 3
      %p179 = por %p177, %p178
      %p181 = scmp.ne.s32.totalorder %s166, %s180
      %p182 = scmp.eq.s32.totalorder %s30, 0
      %p183 = por %p181, %p182
      %s185 = sadd.s32 %s184, 1
      %p188 = scmp.eq.s32.totalorder %s24, 3
      %p189 = scmp.ne.s32.totalorder %s184, %s186
      %p190 = scmp.eq.s32.totalorder %s24, 0
      %p191 = por %p189, %p190
      %p192 = scmp.ne.s32.totalorder %s184, %s186
      %p193 = scmp.eq.s32.totalorder %s29, 3
      %p194 = por %p192, %p193
      %p195 = scmp.ne.s32.totalorder %s186, %s187
      %p196 = scmp.eq.s32.totalorder %s29, 0
      %p197 = por %p195, %p196
      %p198 = scmp.ne.s32.totalorder %s186, %s187
      %p199 = scmp.eq.s32.totalorder %s30, 3
      %p200 = por %p198, %p199
      %p202 = scmp.ne.s32.totalorder %s187, %s201
      %p203 = scmp.eq.s32.totalorder %s30, 0
      %p204 = por %p202, %p203
      %s206 = sadd.s32 %s205, 1
      %p209 = scmp.eq.s32.totalorder %s24, 3
      %p210 = scmp.ne.s32.totalorder %s205, %s207
      %p211 = scmp.eq.s32.totalorder %s24, 0
      %p212 = por %p210, %p211
      %p213 = scmp.ne.s32.totalorder %s205, %s207
      %p214 = scmp.eq.s32.totalorder %s29, 3
      %p215 = por %p213, %p214
      %p216 = scmp.ne.s32.totalorder %s207, %s208
      %p217 = scmp.eq.s32.totalorder %s29, 0
      %p218 = por %p216, %p217
      %p219 = scmp.ne.s32.totalorder %s207, %s208
      %p220 = scmp.eq.s32.totalorder %s30, 3
      %p221 = por %p219, %p220
      %p223 = scmp.ne.s32.totalorder %s208, %s222
      %p224 = scmp.eq.s32.totalorder %s30, 0
      %p225 = por %p223, %p224
      %s227 = sadd.s32 %s226, 1
      %p230 = scmp.eq.s32.totalorder %s24, 3
      %p231 = scmp.ne.s32.totalorder %s226, %s228
      %p232 = scmp.eq.s32.totalorder %s24, 0
      %p233 = por %p231, %p232
      %p234 = scmp.ne.s32.totalorder %s226, %s228
      %p235 = scmp.eq.s32.totalorder %s29, 3
      %p236 = por %p234, %p235
      %p237 = scmp.ne.s32.totalorder %s228, %s229
      %p238 = scmp.eq.s32.totalorder %s29, 0
      %p239 = por %p237, %p238
      %p240 = scmp.ne.s32.totalorder %s228, %s229
      %p241 = scmp.eq.s32.totalorder %s30, 3
      %p242 = por %p240, %p241
      %p244 = scmp.ne.s32.totalorder %s229, %s243
      %p245 = scmp.eq.s32.totalorder %s30, 0
      %p246 = por %p244, %p245
      %s248 = sadd.s32 %s247, 1
      %p251 = scmp.eq.s32.totalorder %s24, 3
      %p252 = scmp.ne.s32.totalorder %s247, %s249
      %p253 = scmp.eq.s32.totalorder %s24, 0
      %p254 = por %p252, %p253
      %p255 = scmp.ne.s32.totalorder %s247, %s249
      %p256 = scmp.eq.s32.totalorder %s29, 3
      %p257 = por %p255, %p256
      %p258 = scmp.ne.s32.totalorder %s249, %s250
      %p259 = scmp.eq.s32.totalorder %s29, 0
      %p260 = por %p258, %p259
      %p261 = scmp.ne.s32.totalorder %s249, %s250
      %p262 = scmp.eq.s32.totalorder %s30, 3
      %p263 = por %p261, %p262
      %p265 = scmp.ne.s32.totalorder %s250, %s264
      %p266 = scmp.eq.s32.totalorder %s30, 0
      %p267 = por %p265, %p266
      %s269 = sadd.s32 %s268, 1
      %p272 = scmp.eq.s32.totalorder %s24, 3
      %p273 = scmp.ne.s32.totalorder %s268, %s270
      %p274 = scmp.eq.s32.totalorder %s24, 0
      %p275 = por %p273, %p274
      %p276 = scmp.ne.s32.totalorder %s268, %s270
      %p277 = scmp.eq.s32.totalorder %s29, 3
      %p278 = por %p276, %p277
      %p279 = scmp.ne.s32.totalorder %s270, %s271
      %p280 = scmp.eq.s32.totalorder %s29, 0
      %p281 = por %p279, %p280
      %p282 = scmp.ne.s32.totalorder %s270, %s271
      %p283 = scmp.eq.s32.totalorder %s30, 3
      %p284 = por %p282, %p283
      %p286 = scmp.ne.s32.totalorder %s271, %s285
      %p287 = scmp.eq.s32.totalorder %s30, 0
      %p288 = por %p286, %p287
      %s290 = sadd.s32 %s289, 1
      %p293 = scmp.eq.s32.totalorder %s24, 3
      %p294 = scmp.ne.s32.totalorder %s289, %s291
      %p295 = scmp.eq.s32.totalorder %s24, 0
      %p296 = por %p294, %p295
      %p297 = scmp.ne.s32.totalorder %s289, %s291
      %p298 = scmp.eq.s32.totalorder %s29, 3
      %p299 = por %p297, %p298
      %p300 = scmp.ne.s32.totalorder %s291, %s292
      %p301 = scmp.eq.s32.totalorder %s29, 0
      %p302 = por %p300, %p301
      %p303 = scmp.ne.s32.totalorder %s291, %s292
      %p304 = scmp.eq.s32.totalorder %s30, 3
      %p305 = por %p303, %p304
      %p307 = scmp.ne.s32.totalorder %s292, %s306
      %p308 = scmp.eq.s32.totalorder %s30, 0
      %p309 = por %p307, %p308
      %s310 = ssub.s32 %s24, %s31
      %p311 = scmp.eq.s32.totalorder %s310, 0
      %s313 = sadd.s32 %s312, 1
      %s314 = scalar_select %p311, %s312, %s313
      %p317 = pneg %p311
      %p318 = scmp.eq.s32.totalorder %s24, 3
      %p319 = por %p317, %p318
      %p320 = scmp.ne.s32.totalorder %s312, %s315
      %p321 = scmp.eq.s32.totalorder %s24, 0
      %p322 = por %p320, %p321
      %p323 = scmp.ne.s32.totalorder %s312, %s315
      %p324 = scmp.eq.s32.totalorder %s29, 3
      %p325 = por %p323, %p324
      %p326 = scmp.ne.s32.totalorder %s315, %s316
      %p327 = scmp.eq.s32.totalorder %s29, 0
      %p328 = por %p326, %p327
      %p329 = scmp.ne.s32.totalorder %s315, %s316
      %p330 = scmp.eq.s32.totalorder %s30, 3
      %p331 = por %p329, %p330
      %p333 = scmp.ne.s32.totalorder %s316, %s332
      %p334 = scmp.eq.s32.totalorder %s30, 0
      %p335 = por %p333, %p334
      %p336 = scmp.le.s32.totalorder 1, %s24
      %p337 = scmp.lt.s32.totalorder %s24, 5
      %p338 = pnand %p336, %p337
      %p339 = pneg %p338
      // Predicated region
      $region9: #{tpu_custom_call.1} parent=5 // pred_check
        _
      $region10: #{tpu_custom_call.1} parent=5 // pred_check_branch
        %341 = sbr.rel (%p338) target = $region12
      $region11: #{tpu_custom_call.1} parent=5 // pred_region
        %s342 = ssub.s32 %s24, 1
        // Predicated region
        $region13: #{tpu_custom_call.1} parent=11 // pred_check
          %p343 = pneg %p71
        $region14: #{tpu_custom_call.1} parent=11 // pred_check_branch
          %345 = sbr.rel (%p343) target = $region16
        $region15: #{tpu_custom_call.1} parent=11 // pred_region
          %347 = vsyncadd [#allocation3], 0
          %s348 = sshll.u32 %s1, 4
          %s349 = int_to_ptr.hbm [resolvable:$true] %s348
          %s350 = sshll.u32 [#allocation2], 4
          %s351 = int_to_ptr.vmem [resolvable:$true] %s350
          %356 = dma.hbm_to_vmem [thread:$0]  %s349, 256, %s351, [#allocation3], 64, 64, 4
        $region16: #{tpu_custom_call.1} parent=11 // pred_fallthru
          _
        // Predicated region
        $region17: #{tpu_custom_call.1} parent=11 // pred_check
          %p357 = pneg %p92
        $region18: #{tpu_custom_call.1} parent=11 // pred_check_branch
          %359 = sbr.rel (%p357) target = $region20
        $region19: #{tpu_custom_call.1} parent=11 // pred_region
          %361 = vsyncadd [#allocation6], 0
          %s363 = sshll.u32 %s2, 4
          %s364 = int_to_ptr.hbm [resolvable:$true] %s363
          %s365 = sshll.u32 [#allocation5], 4
          %s366 = int_to_ptr.vmem [resolvable:$true] %s365
          %368 = dma.hbm_to_vmem [thread:$0]  %s364, 16, %s366, [#allocation6]
        $region20: #{tpu_custom_call.1} parent=11 // pred_fallthru
          _
        // Predicated region
        $region21: #{tpu_custom_call.1} parent=11 // pred_check
          %p369 = pneg %p113
        $region22: #{tpu_custom_call.1} parent=11 // pred_check_branch
          %371 = sbr.rel (%p369) target = $region24
        $region23: #{tpu_custom_call.1} parent=11 // pred_region
          _
        $region24: #{tpu_custom_call.1} parent=11 // pred_fallthru
          _
        // Predicated region
        $region25: #{tpu_custom_call.1} parent=11 // pred_check
          %p372 = pneg %p134
        $region26: #{tpu_custom_call.1} parent=11 // pred_check_branch
          %374 = sbr.rel (%p372) target = $region28
        $region27: #{tpu_custom_call.1} parent=11 // pred_region
          _
        $region28: #{tpu_custom_call.1} parent=11 // pred_fallthru
          _
        // Predicated region
        $region29: #{tpu_custom_call.1} parent=11 // pred_check
          %p375 = pneg %p155
        $region30: #{tpu_custom_call.1} parent=11 // pred_check_branch
          %377 = sbr.rel (%p375) target = $region32
        $region31: #{tpu_custom_call.1} parent=11 // pred_region
          _
        $region32: #{tpu_custom_call.1} parent=11 // pred_fallthru
          _
        // Predicated region
        $region33: #{tpu_custom_call.1} parent=11 // pred_check
          %p378 = pneg %p176
        $region34: #{tpu_custom_call.1} parent=11 // pred_check_branch
          %380 = sbr.rel (%p378) target = $region36
        $region35: #{tpu_custom_call.1} parent=11 // pred_region
          _
        $region36: #{tpu_custom_call.1} parent=11 // pred_fallthru
          _
        // Predicated region
        $region37: #{tpu_custom_call.1} parent=11 // pred_check
          %p381 = pneg %p197
        $region38: #{tpu_custom_call.1} parent=11 // pred_check_branch
          %383 = sbr.rel (%p381) target = $region40
        $region39: #{tpu_custom_call.1} parent=11 // pred_region
          _
        $region40: #{tpu_custom_call.1} parent=11 // pred_fallthru
          _
        // Predicated region
        $region41: #{tpu_custom_call.1} parent=11 // pred_check
          %p384 = pneg %p218
        $region42: #{tpu_custom_call.1} parent=11 // pred_check_branch
          %386 = sbr.rel (%p384) target = $region44
        $region43: #{tpu_custom_call.1} parent=11 // pred_region
          _
        $region44: #{tpu_custom_call.1} parent=11 // pred_fallthru
          _
        // Predicated region
        $region45: #{tpu_custom_call.1} parent=11 // pred_check
          %p387 = pneg %p239
        $region46: #{tpu_custom_call.1} parent=11 // pred_check_branch
          %389 = sbr.rel (%p387) target = $region48
        $region47: #{tpu_custom_call.1} parent=11 // pred_region
          _
        $region48: #{tpu_custom_call.1} parent=11 // pred_fallthru
          _
        // Predicated region
        $region49: #{tpu_custom_call.1} parent=11 // pred_check
          %p390 = pneg %p260
        $region50: #{tpu_custom_call.1} parent=11 // pred_check_branch
          %392 = sbr.rel (%p390) target = $region52
        $region51: #{tpu_custom_call.1} parent=11 // pred_region
          _
        $region52: #{tpu_custom_call.1} parent=11 // pred_fallthru
          _
        // Predicated region
        $region53: #{tpu_custom_call.1} parent=11 // pred_check
          %p393 = pneg %p281
        $region54: #{tpu_custom_call.1} parent=11 // pred_check_branch
          %395 = sbr.rel (%p393) target = $region56
        $region55: #{tpu_custom_call.1} parent=11 // pred_region
          _
        $region56: #{tpu_custom_call.1} parent=11 // pred_fallthru
          _
        // Predicated region
        $region57: #{tpu_custom_call.1} parent=11 // pred_check
          %p396 = pneg %p302
        $region58: #{tpu_custom_call.1} parent=11 // pred_check_branch
          %398 = sbr.rel (%p396) target = $region60
        $region59: #{tpu_custom_call.1} parent=11 // pred_region
          _
        $region60: #{tpu_custom_call.1} parent=11 // pred_fallthru
          _
      $region12: #{tpu_custom_call.1} parent=5 // pred_fallthru
        _
      %p399 = scmp.lt.s32.totalorder %s24, 4
      // Predicated region
      $region61: #{tpu_custom_call.1} parent=5 // pred_check
        %p400 = pneg %p399
      $region62: #{tpu_custom_call.1} parent=5 // pred_check_branch
        %402 = sbr.rel (%p400) target = $region64
      $region63: #{tpu_custom_call.1} parent=5 // pred_region
        // Predicated region
        $region65: #{tpu_custom_call.1} parent=63 // pred_check
          %p403 = pneg %p44
        $region66: #{tpu_custom_call.1} parent=63 // pred_check_branch
          %405 = sbr.rel (%p403) target = $region68
        $region67: #{tpu_custom_call.1} parent=63 // pred_region
          %s406 = smul.u32 8, %s24
          %p407 = scmp.lt.s32.totalorder %s406, 31
          %s408 = scalar_select %p407, %s406, 31
          %s409 = smul.addr %s408, 8
          %s410 = scalar_lea.vmem %s0, %s409
          %s411 = smul.u32 8, %s24
        $region68: #{tpu_custom_call.1} parent=63 // pred_fallthru
          _
      $region64: #{tpu_custom_call.1} parent=5 // pred_fallthru
        _
      %p412 = scmp.le.s32.totalorder 1, %s24
      %p413 = scmp.lt.s32.totalorder %s24, 5
      %p414 = pnand %p412, %p413
      %p415 = pneg %p414
      // Predicated region
      $region69: #{tpu_custom_call.1} parent=5 // pred_check
        _
      $region70: #{tpu_custom_call.1} parent=5 // pred_check_branch
        %417 = sbr.rel (%p414) target = $region72
      $region71: #{tpu_custom_call.1} parent=5 // pred_region
        %s418 = ssub.s32 %s24, 1
        // Predicated region
        $region73: #{tpu_custom_call.1} parent=71 // pred_check
          %p419 = pneg %p71
        $region74: #{tpu_custom_call.1} parent=71 // pred_check_branch
          %421 = sbr.rel (%p419) target = $region76
        $region75: #{tpu_custom_call.1} parent=71 // pred_region
          %423 = dma.done [#allocation3], 256
        $region76: #{tpu_custom_call.1} parent=71 // pred_fallthru
          _
        // Predicated region
        $region77: #{tpu_custom_call.1} parent=71 // pred_check
          %p424 = pneg %p92
        $region78: #{tpu_custom_call.1} parent=71 // pred_check_branch
          %426 = sbr.rel (%p424) target = $region80
        $region79: #{tpu_custom_call.1} parent=71 // pred_region
          %428 = dma.done [#allocation6], 16
        $region80: #{tpu_custom_call.1} parent=71 // pred_fallthru
          _
        %s429 = smul.u32 8, %s29
        %p430 = scmp.lt.s32.totalorder %s429, 31
        %s431 = scalar_select %p430, %s429, 31
        %s432 = smul.addr %s431, 8
        %s433 = scalar_lea.vmem %s0, %s432
        %p434 = pneg %p50
        %p435 = pneg %p47
        %p436 = pneg %p71
        %p437 = pneg %p68
        %p438 = pneg %p92
        %p439 = pneg %p89
        %p440 = pneg %p113
        %p441 = pneg %p110
        %p442 = pneg %p134
        %p443 = pneg %p131
        %p444 = pneg %p155
        %p445 = pneg %p152
        %p446 = pneg %p176
        %p447 = pneg %p173
        %p448 = pneg %p197
        %p449 = pneg %p194
        %p450 = pneg %p218
        %p451 = pneg %p215
        %p452 = pneg %p239
        %p453 = pneg %p236
        %p454 = pneg %p260
        %p455 = pneg %p257
        %p456 = pneg %p281
        %p457 = pneg %p278
        %p458 = pneg %p302
        %p459 = pneg %p299
        %p460 = pneg %p328
        %p461 = pneg %p325
        %s462 = sand.u32 %s315, 1
        %s463 = scalar_lea.sflag [#allocation4], %s462
        %s464 = sand.u32 %s315, 1
        %s465 = smul.addr %s464, 64
        %s466 = scalar_lea.vmem [#allocation7], %s465
        %s467 = smul.u32 8, %s29
        %p468 = scmp.lt.s32.totalorder %s467, 31
        %s469 = scalar_select %p468, %s467, 31
        %s470 = smul.addr %s469, 8
        %s471 = scalar_lea.vmem %s0, %s470
        %s472 = smul.u32 8, %s29
        %s473 = smul.u32 8, %s29
        %v475 = vld [vmem:[%s471] sm:$0xff]
        %v476 = vld [vmem:[%s471 + $0x8] sm:$0xff]
        %v477 = vld [vmem:[%s471 + $0x10] sm:$0xff]
        %v478 = vld [vmem:[%s471 + $0x18] sm:$0xff]
        %v479 = vld [vmem:[%s471 + $0x20] sm:$0xff]
        %v480 = vld [vmem:[%s471 + $0x28] sm:$0xff]
        %v481 = vld [vmem:[%s471 + $0x30] sm:$0xff]
        %v482 = vld [vmem:[%s471 + $0x38] sm:$0xff]
        %v483 = vpack.c.bf16 %v476, %v475
        %v484 = vpack.c.bf16 %v478, %v477
        %v485 = vpack.c.bf16 %v480, %v479
        %v486 = vpack.c.bf16 %v482, %v481
        %v487 = vld [vmem:[#allocation2] sm:$0xf]
        %v488 = vld [vmem:[#allocation2 + $0x4] sm:$0xf]
        %v489 = vld [vmem:[#allocation2 + $0x8] sm:$0xf]
        %v490 = vld [vmem:[#allocation2 + $0xc] sm:$0xf]
        %v491 = vld [vmem:[#allocation5] sm:$0x1]
        %v493 = vperm.slane %v491, 0
        %v499 = vunpack.c.l.b16 %v487
        %v500 = vunpack.c.l.b16 %v488
        %v501 = vunpack.c.l.b16 %v489
        %v502 = vunpack.c.l.b16 %v490
        %v503 = vpack.c.b16 %v500, %v499
        %v504 = vpack.c.b16 %v502, %v501
        %vm507 = vcmask 261120
        %v509 = vsel %vm507, %v483, 0
        %v512 = vsel %vm507, %v484, 0
        %v515 = vsel %vm507, %v485, 0
        %v518 = vsel %vm507, %v486, 0
        %520 = vmatpush.bf16.msra.mxu0 0
        %521 = vmatpush.bf16.msra.mxu0 0
        %522 = vmatpush.bf16.msra.mxu0 0
        %523 = vmatpush.bf16.msra.mxu0 0
        %524 = vmatpush.bf16.msra.mxu0 0
        %525 = vmatpush.bf16.msra.mxu0 0
        %526 = vmatpush.bf16.msra.mxu0 %v504
        %527 = vmatpush.bf16.msra.mxu0 %v503
        %528 = vmatmul.bf16.gmra.mxu0 %v509
        %v529 = vpop.f32.mrf.mxu0
        %v530 = vadd.f32 %v493, %v529
        %v531 = vpop.f32.mrf.mxu0
        %v532 = vadd.f32 %v493, %v531
        %533 = vmatmul.bf16.gmra.mxu0 %v512
        %v534 = vpop.f32.mrf.mxu0
        %v535 = vadd.f32 %v493, %v534
        %v536 = vpop.f32.mrf.mxu0
        %v537 = vadd.f32 %v493, %v536
        %538 = vmatmul.bf16.gmra.mxu0 %v515
        %v539 = vpop.f32.mrf.mxu0
        %v540 = vadd.f32 %v493, %v539
        %v541 = vpop.f32.mrf.mxu0
        %v542 = vadd.f32 %v493, %v541
        %543 = vmatmul.bf16.gmra.mxu0 %v518
        %v544 = vpop.f32.mrf.mxu0
        %v545 = vadd.f32 %v493, %v544
        %v546 = vpop.f32.mrf.mxu0
        %v547 = vadd.f32 %v493, %v546
        %548 = vdwg.mxu0
        %v549 = vmax.f32 %v530, 0.0
        %v550 = vmax.f32 %v532, 0.0
        %v551 = vmax.f32 %v535, 0.0
        %v552 = vmax.f32 %v537, 0.0
        %v553 = vmax.f32 %v540, 0.0
        %v554 = vmax.f32 %v542, 0.0
        %v555 = vmax.f32 %v545, 0.0
        %v556 = vmax.f32 %v547, 0.0
        %v557 = vpack.c.bf16 %v550, %v549
        %v558 = vpack.c.bf16 %v552, %v551
        %v559 = vpack.c.bf16 %v554, %v553
        %v560 = vpack.c.bf16 %v556, %v555
        %v561 = vld [vmem:[%s3] sm:$0xf]
        %v562 = vld [vmem:[%s3 + $0x4] sm:$0xf]
        %v563 = vld [vmem:[%s3 + $0x8] sm:$0xf]
        %v564 = vld [vmem:[%s3 + $0xc] sm:$0xf]
        %v565 = vld [vmem:[%s3 + $0x10] sm:$0xf]
        %v566 = vld [vmem:[%s3 + $0x14] sm:$0xf]
        %v567 = vld [vmem:[%s3 + $0x18] sm:$0xf]
        %v568 = vld [vmem:[%s3 + $0x1c] sm:$0xf]
        %v569 = vld [vmem:[%s3 + $0x20] sm:$0xf]
        %v570 = vld [vmem:[%s3 + $0x24] sm:$0xf]
        %v571 = vld [vmem:[%s3 + $0x28] sm:$0xf]
        %v572 = vld [vmem:[%s3 + $0x2c] sm:$0xf]
        %v573 = vld [vmem:[%s3 + $0x30] sm:$0xf]
        %v574 = vld [vmem:[%s3 + $0x34] sm:$0xf]
        %v575 = vld [vmem:[%s3 + $0x38] sm:$0xf]
        %v576 = vld [vmem:[%s3 + $0x3c] sm:$0xf]
        %v577 = vld [vmem:[%s4] sm:$0x1]
        %v579 = vperm.slane %v577, 0
        %v597 = vunpack.c.l.b16 %v561
        %v598 = vunpack.c.l.b16 %v562
        %v599 = vunpack.c.l.b16 %v563
        %v600 = vunpack.c.l.b16 %v564
        %v601 = vunpack.c.l.b16 %v565
        %v602 = vunpack.c.l.b16 %v566
        %v603 = vunpack.c.l.b16 %v567
        %v604 = vunpack.c.l.b16 %v568
        %v605 = vunpack.c.l.b16 %v569
        %v606 = vunpack.c.l.b16 %v570
        %v607 = vunpack.c.l.b16 %v571
        %v608 = vunpack.c.l.b16 %v572
        %v609 = vunpack.c.l.b16 %v573
        %v610 = vunpack.c.l.b16 %v574
        %v611 = vunpack.c.l.b16 %v575
        %v612 = vunpack.c.l.b16 %v576
        %v613 = vpack.c.b16 %v598, %v597
        %v614 = vpack.c.b16 %v600, %v599
        %v615 = vpack.c.b16 %v602, %v601
        %v616 = vpack.c.b16 %v604, %v603
        %v617 = vpack.c.b16 %v606, %v605
        %v618 = vpack.c.b16 %v608, %v607
        %v619 = vpack.c.b16 %v610, %v609
        %v620 = vpack.c.b16 %v612, %v611
        %629 = vmatpush.bf16.msra.mxu0 %v620
        %630 = vmatpush.bf16.msra.mxu0 %v619
        %631 = vmatpush.bf16.msra.mxu0 %v618
        %632 = vmatpush.bf16.msra.mxu0 %v617
        %633 = vmatpush.bf16.msra.mxu0 %v616
        %634 = vmatpush.bf16.msra.mxu0 %v615
        %635 = vmatpush.bf16.msra.mxu0 %v614
        %636 = vmatpush.bf16.msra.mxu0 %v613
        %637 = vmatmul.bf16.gmra.mxu0 %v557
        %v638 = vpop.f32.mrf.mxu0
        %v639 = vadd.f32 %v579, %v638
        %v640 = vpop.f32.mrf.mxu0
        %v641 = vadd.f32 %v579, %v640
        %642 = vmatmul.bf16.gmra.mxu0 %v558
        %v643 = vpop.f32.mrf.mxu0
        %v644 = vadd.f32 %v579, %v643
        %v645 = vpop.f32.mrf.mxu0
        %v646 = vadd.f32 %v579, %v645
        %647 = vmatmul.bf16.gmra.mxu0 %v559
        %v648 = vpop.f32.mrf.mxu0
        %v649 = vadd.f32 %v579, %v648
        %v650 = vpop.f32.mrf.mxu0
        %v651 = vadd.f32 %v579, %v650
        %652 = vmatmul.bf16.gmra.mxu0 %v560
        %v653 = vpop.f32.mrf.mxu0
        %v654 = vadd.f32 %v579, %v653
        %v655 = vpop.f32.mrf.mxu0
        %v656 = vadd.f32 %v579, %v655
        %657 = vdwg.mxu0
        %v658 = vmax.f32 %v639, 0.0
        %v659 = vmax.f32 %v641, 0.0
        %v660 = vmax.f32 %v644, 0.0
        %v661 = vmax.f32 %v646, 0.0
        %v662 = vmax.f32 %v649, 0.0
        %v663 = vmax.f32 %v651, 0.0
        %v664 = vmax.f32 %v654, 0.0
        %v665 = vmax.f32 %v656, 0.0
        %v666 = vpack.c.bf16 %v659, %v658
        %v667 = vpack.c.bf16 %v661, %v660
        %v668 = vpack.c.bf16 %v663, %v662
        %v669 = vpack.c.bf16 %v665, %v664
        %v670 = vld [vmem:[%s5] sm:$0xf]
        %v671 = vld [vmem:[%s5 + $0x4] sm:$0xf]
        %v672 = vld [vmem:[%s5 + $0x8] sm:$0xf]
        %v673 = vld [vmem:[%s5 + $0xc] sm:$0xf]
        %v674 = vld [vmem:[%s5 + $0x10] sm:$0xf]
        %v675 = vld [vmem:[%s5 + $0x14] sm:$0xf]
        %v676 = vld [vmem:[%s5 + $0x18] sm:$0xf]
        %v677 = vld [vmem:[%s5 + $0x1c] sm:$0xf]
        %v678 = vld [vmem:[%s5 + $0x20] sm:$0xf]
        %v679 = vld [vmem:[%s5 + $0x24] sm:$0xf]
        %v680 = vld [vmem:[%s5 + $0x28] sm:$0xf]
        %v681 = vld [vmem:[%s5 + $0x2c] sm:$0xf]
        %v682 = vld [vmem:[%s5 + $0x30] sm:$0xf]
        %v683 = vld [vmem:[%s5 + $0x34] sm:$0xf]
        %v684 = vld [vmem:[%s5 + $0x38] sm:$0xf]
        %v685 = vld [vmem:[%s5 + $0x3c] sm:$0xf]
        %v686 = vld [vmem:[%s6] sm:$0x1]
        %v688 = vperm.slane %v686, 0
        %v706 = vunpack.c.l.b16 %v670
        %v707 = vunpack.c.l.b16 %v671
        %v708 = vunpack.c.l.b16 %v672
        %v709 = vunpack.c.l.b16 %v673
        %v710 = vunpack.c.l.b16 %v674
        %v711 = vunpack.c.l.b16 %v675
        %v712 = vunpack.c.l.b16 %v676
        %v713 = vunpack.c.l.b16 %v677
        %v714 = vunpack.c.l.b16 %v678
        %v715 = vunpack.c.l.b16 %v679
        %v716 = vunpack.c.l.b16 %v680
        %v717 = vunpack.c.l.b16 %v681
        %v718 = vunpack.c.l.b16 %v682
        %v719 = vunpack.c.l.b16 %v683
        %v720 = vunpack.c.l.b16 %v684
        %v721 = vunpack.c.l.b16 %v685
        %v722 = vpack.c.b16 %v707, %v706
        %v723 = vpack.c.b16 %v709, %v708
        %v724 = vpack.c.b16 %v711, %v710
        %v725 = vpack.c.b16 %v713, %v712
        %v726 = vpack.c.b16 %v715, %v714
        %v727 = vpack.c.b16 %v717, %v716
        %v728 = vpack.c.b16 %v719, %v718
        %v729 = vpack.c.b16 %v721, %v720
        %738 = vmatpush.bf16.msra.mxu0 %v729
        %739 = vmatpush.bf16.msra.mxu0 %v728
        %740 = vmatpush.bf16.msra.mxu0 %v727
        %741 = vmatpush.bf16.msra.mxu0 %v726
        %742 = vmatpush.bf16.msra.mxu0 %v725
        %743 = vmatpush.bf16.msra.mxu0 %v724
        %744 = vmatpush.bf16.msra.mxu0 %v723
        %745 = vmatpush.bf16.msra.mxu0 %v722
        %746 = vmatmul.bf16.gmra.mxu0 %v666
        %v747 = vpop.f32.mrf.mxu0
        %v748 = vadd.f32 %v688, %v747
        %v749 = vpop.f32.mrf.mxu0
        %v750 = vadd.f32 %v688, %v749
        %751 = vmatmul.bf16.gmra.mxu0 %v667
        %v752 = vpop.f32.mrf.mxu0
        %v753 = vadd.f32 %v688, %v752
        %v754 = vpop.f32.mrf.mxu0
        %v755 = vadd.f32 %v688, %v754
        %756 = vmatmul.bf16.gmra.mxu0 %v668
        %v757 = vpop.f32.mrf.mxu0
        %v758 = vadd.f32 %v688, %v757
        %v759 = vpop.f32.mrf.mxu0
        %v760 = vadd.f32 %v688, %v759
        %761 = vmatmul.bf16.gmra.mxu0 %v669
        %v762 = vpop.f32.mrf.mxu0
        %v763 = vadd.f32 %v688, %v762
        %v764 = vpop.f32.mrf.mxu0
        %v765 = vadd.f32 %v688, %v764
        %766 = vdwg.mxu0
        %v767 = vadd.f32 %v530, %v748
        %v768 = vadd.f32 %v532, %v750
        %v769 = vadd.f32 %v535, %v753
        %v770 = vadd.f32 %v537, %v755
        %v771 = vadd.f32 %v540, %v758
        %v772 = vadd.f32 %v542, %v760
        %v773 = vadd.f32 %v545, %v763
        %v774 = vadd.f32 %v547, %v765
        %v775 = vmax.f32 %v767, 0.0
        %v776 = vmax.f32 %v768, 0.0
        %v777 = vmax.f32 %v769, 0.0
        %v778 = vmax.f32 %v770, 0.0
        %v779 = vmax.f32 %v771, 0.0
        %v780 = vmax.f32 %v772, 0.0
        %v781 = vmax.f32 %v773, 0.0
        %v782 = vmax.f32 %v774, 0.0
        %v783 = vpack.c.bf16 %v776, %v775
        %v784 = vpack.c.bf16 %v778, %v777
        %v785 = vpack.c.bf16 %v780, %v779
        %v786 = vpack.c.bf16 %v782, %v781
        %v787 = vld [vmem:[%s7] sm:$0xf]
        %v788 = vld [vmem:[%s7 + $0x4] sm:$0xf]
        %v789 = vld [vmem:[%s7 + $0x8] sm:$0xf]
        %v790 = vld [vmem:[%s7 + $0xc] sm:$0xf]
        %v791 = vld [vmem:[%s7 + $0x10] sm:$0xf]
        %v792 = vld [vmem:[%s7 + $0x14] sm:$0xf]
        %v793 = vld [vmem:[%s7 + $0x18] sm:$0xf]
        %v794 = vld [vmem:[%s7 + $0x1c] sm:$0xf]
        %v795 = vld [vmem:[%s7 + $0x20] sm:$0xf]
        %v796 = vld [vmem:[%s7 + $0x24] sm:$0xf]
        %v797 = vld [vmem:[%s7 + $0x28] sm:$0xf]
        %v798 = vld [vmem:[%s7 + $0x2c] sm:$0xf]
        %v799 = vld [vmem:[%s7 + $0x30] sm:$0xf]
        %v800 = vld [vmem:[%s7 + $0x34] sm:$0xf]
        %v801 = vld [vmem:[%s7 + $0x38] sm:$0xf]
        %v802 = vld [vmem:[%s7 + $0x3c] sm:$0xf]
        %v803 = vld [vmem:[%s8] sm:$0x1]
        %v805 = vperm.slane %v803, 0
        %v823 = vunpack.c.l.b16 %v787
        %v824 = vunpack.c.l.b16 %v788
        %v825 = vunpack.c.l.b16 %v789
        %v826 = vunpack.c.l.b16 %v790
        %v827 = vunpack.c.l.b16 %v791
        %v828 = vunpack.c.l.b16 %v792
        %v829 = vunpack.c.l.b16 %v793
        %v830 = vunpack.c.l.b16 %v794
        %v831 = vunpack.c.l.b16 %v795
        %v832 = vunpack.c.l.b16 %v796
        %v833 = vunpack.c.l.b16 %v797
        %v834 = vunpack.c.l.b16 %v798
        %v835 = vunpack.c.l.b16 %v799
        %v836 = vunpack.c.l.b16 %v800
        %v837 = vunpack.c.l.b16 %v801
        %v838 = vunpack.c.l.b16 %v802
        %v839 = vpack.c.b16 %v824, %v823
        %v840 = vpack.c.b16 %v826, %v825
        %v841 = vpack.c.b16 %v828, %v827
        %v842 = vpack.c.b16 %v830, %v829
        %v843 = vpack.c.b16 %v832, %v831
        %v844 = vpack.c.b16 %v834, %v833
        %v845 = vpack.c.b16 %v836, %v835
        %v846 = vpack.c.b16 %v838, %v837
        %855 = vmatpush.bf16.msra.mxu0 %v846
        %856 = vmatpush.bf16.msra.mxu0 %v845
        %857 = vmatpush.bf16.msra.mxu0 %v844
        %858 = vmatpush.bf16.msra.mxu0 %v843
        %859 = vmatpush.bf16.msra.mxu0 %v842
        %860 = vmatpush.bf16.msra.mxu0 %v841
        %861 = vmatpush.bf16.msra.mxu0 %v840
        %862 = vmatpush.bf16.msra.mxu0 %v839
        %863 = vmatmul.bf16.gmra.mxu0 %v783
        %v864 = vpop.f32.mrf.mxu0
        %v865 = vadd.f32 %v805, %v864
        %v866 = vpop.f32.mrf.mxu0
        %v867 = vadd.f32 %v805, %v866
        %868 = vmatmul.bf16.gmra.mxu0 %v784
        %v869 = vpop.f32.mrf.mxu0
        %v870 = vadd.f32 %v805, %v869
        %v871 = vpop.f32.mrf.mxu0
        %v872 = vadd.f32 %v805, %v871
        %873 = vmatmul.bf16.gmra.mxu0 %v785
        %v874 = vpop.f32.mrf.mxu0
        %v875 = vadd.f32 %v805, %v874
        %v876 = vpop.f32.mrf.mxu0
        %v877 = vadd.f32 %v805, %v876
        %878 = vmatmul.bf16.gmra.mxu0 %v786
        %v879 = vpop.f32.mrf.mxu0
        %v880 = vadd.f32 %v805, %v879
        %v881 = vpop.f32.mrf.mxu0
        %v882 = vadd.f32 %v805, %v881
        %883 = vdwg.mxu0
        %v884 = vmax.f32 %v865, 0.0
        %v885 = vmax.f32 %v867, 0.0
        %v886 = vmax.f32 %v870, 0.0
        %v887 = vmax.f32 %v872, 0.0
        %v888 = vmax.f32 %v875, 0.0
        %v889 = vmax.f32 %v877, 0.0
        %v890 = vmax.f32 %v880, 0.0
        %v891 = vmax.f32 %v882, 0.0
        %v892 = vpack.c.bf16 %v885, %v884
        %v893 = vpack.c.bf16 %v887, %v886
        %v894 = vpack.c.bf16 %v889, %v888
        %v895 = vpack.c.bf16 %v891, %v890
        %v896 = vld [vmem:[%s9] sm:$0xf]
        %v897 = vld [vmem:[%s9 + $0x4] sm:$0xf]
        %v898 = vld [vmem:[%s9 + $0x8] sm:$0xf]
        %v899 = vld [vmem:[%s9 + $0xc] sm:$0xf]
        %v900 = vld [vmem:[%s9 + $0x10] sm:$0xf]
        %v901 = vld [vmem:[%s9 + $0x14] sm:$0xf]
        %v902 = vld [vmem:[%s9 + $0x18] sm:$0xf]
        %v903 = vld [vmem:[%s9 + $0x1c] sm:$0xf]
        %v904 = vld [vmem:[%s9 + $0x20] sm:$0xf]
        %v905 = vld [vmem:[%s9 + $0x24] sm:$0xf]
        %v906 = vld [vmem:[%s9 + $0x28] sm:$0xf]
        %v907 = vld [vmem:[%s9 + $0x2c] sm:$0xf]
        %v908 = vld [vmem:[%s9 + $0x30] sm:$0xf]
        %v909 = vld [vmem:[%s9 + $0x34] sm:$0xf]
        %v910 = vld [vmem:[%s9 + $0x38] sm:$0xf]
        %v911 = vld [vmem:[%s9 + $0x3c] sm:$0xf]
        %v912 = vld [vmem:[%s10] sm:$0x1]
        %v914 = vperm.slane %v912, 0
        %v932 = vunpack.c.l.b16 %v896
        %v933 = vunpack.c.l.b16 %v897
        %v934 = vunpack.c.l.b16 %v898
        %v935 = vunpack.c.l.b16 %v899
        %v936 = vunpack.c.l.b16 %v900
        %v937 = vunpack.c.l.b16 %v901
        %v938 = vunpack.c.l.b16 %v902
        %v939 = vunpack.c.l.b16 %v903
        %v940 = vunpack.c.l.b16 %v904
        %v941 = vunpack.c.l.b16 %v905
        %v942 = vunpack.c.l.b16 %v906
        %v943 = vunpack.c.l.b16 %v907
        %v944 = vunpack.c.l.b16 %v908
        %v945 = vunpack.c.l.b16 %v909
        %v946 = vunpack.c.l.b16 %v910
        %v947 = vunpack.c.l.b16 %v911
        %v948 = vpack.c.b16 %v933, %v932
        %v949 = vpack.c.b16 %v935, %v934
        %v950 = vpack.c.b16 %v937, %v936
        %v951 = vpack.c.b16 %v939, %v938
        %v952 = vpack.c.b16 %v941, %v940
        %v953 = vpack.c.b16 %v943, %v942
        %v954 = vpack.c.b16 %v945, %v944
        %v955 = vpack.c.b16 %v947, %v946
        %964 = vmatpush.bf16.msra.mxu0 %v955
        %965 = vmatpush.bf16.msra.mxu0 %v954
        %966 = vmatpush.bf16.msra.mxu0 %v953
        %967 = vmatpush.bf16.msra.mxu0 %v952
        %968 = vmatpush.bf16.msra.mxu0 %v951
        %969 = vmatpush.bf16.msra.mxu0 %v950
        %970 = vmatpush.bf16.msra.mxu0 %v949
        %971 = vmatpush.bf16.msra.mxu0 %v948
        %972 = vmatmul.bf16.gmra.mxu0 %v892
        %v973 = vpop.f32.mrf.mxu0
        %v974 = vadd.f32 %v914, %v973
        %v975 = vpop.f32.mrf.mxu0
        %v976 = vadd.f32 %v914, %v975
        %977 = vmatmul.bf16.gmra.mxu0 %v893
        %v978 = vpop.f32.mrf.mxu0
        %v979 = vadd.f32 %v914, %v978
        %v980 = vpop.f32.mrf.mxu0
        %v981 = vadd.f32 %v914, %v980
        %982 = vmatmul.bf16.gmra.mxu0 %v894
        %v983 = vpop.f32.mrf.mxu0
        %v984 = vadd.f32 %v914, %v983
        %v985 = vpop.f32.mrf.mxu0
        %v986 = vadd.f32 %v914, %v985
        %987 = vmatmul.bf16.gmra.mxu0 %v895
        %v988 = vpop.f32.mrf.mxu0
        %v989 = vadd.f32 %v914, %v988
        %v990 = vpop.f32.mrf.mxu0
        %v991 = vadd.f32 %v914, %v990
        %992 = vdwg.mxu0
        %v993 = vadd.f32 %v767, %v974
        %v994 = vadd.f32 %v768, %v976
        %v995 = vadd.f32 %v769, %v979
        %v996 = vadd.f32 %v770, %v981
        %v997 = vadd.f32 %v771, %v984
        %v998 = vadd.f32 %v772, %v986
        %v999 = vadd.f32 %v773, %v989
        %v1000 = vadd.f32 %v774, %v991
        %v1001 = vmax.f32 %v993, 0.0
        %v1002 = vmax.f32 %v994, 0.0
        %v1003 = vmax.f32 %v995, 0.0
        %v1004 = vmax.f32 %v996, 0.0
        %v1005 = vmax.f32 %v997, 0.0
        %v1006 = vmax.f32 %v998, 0.0
        %v1007 = vmax.f32 %v999, 0.0
        %v1008 = vmax.f32 %v1000, 0.0
        %v1009 = vpack.c.bf16 %v1002, %v1001
        %v1010 = vpack.c.bf16 %v1004, %v1003
        %v1011 = vpack.c.bf16 %v1006, %v1005
        %v1012 = vpack.c.bf16 %v1008, %v1007
        %v1013 = vld [vmem:[%s11] sm:$0xf]
        %v1014 = vld [vmem:[%s11 + $0x4] sm:$0xf]
        %v1015 = vld [vmem:[%s11 + $0x8] sm:$0xf]
        %v1016 = vld [vmem:[%s11 + $0xc] sm:$0xf]
        %v1017 = vld [vmem:[%s11 + $0x10] sm:$0xf]
        %v1018 = vld [vmem:[%s11 + $0x14] sm:$0xf]
        %v1019 = vld [vmem:[%s11 + $0x18] sm:$0xf]
        %v1020 = vld [vmem:[%s11 + $0x1c] sm:$0xf]
        %v1021 = vld [vmem:[%s11 + $0x20] sm:$0xf]
        %v1022 = vld [vmem:[%s11 + $0x24] sm:$0xf]
        %v1023 = vld [vmem:[%s11 + $0x28] sm:$0xf]
        %v1024 = vld [vmem:[%s11 + $0x2c] sm:$0xf]
        %v1025 = vld [vmem:[%s11 + $0x30] sm:$0xf]
        %v1026 = vld [vmem:[%s11 + $0x34] sm:$0xf]
        %v1027 = vld [vmem:[%s11 + $0x38] sm:$0xf]
        %v1028 = vld [vmem:[%s11 + $0x3c] sm:$0xf]
        %v1029 = vld [vmem:[%s12] sm:$0x1]
        %v1031 = vperm.slane %v1029, 0
        %v1049 = vunpack.c.l.b16 %v1013
        %v1050 = vunpack.c.l.b16 %v1014
        %v1051 = vunpack.c.l.b16 %v1015
        %v1052 = vunpack.c.l.b16 %v1016
        %v1053 = vunpack.c.l.b16 %v1017
        %v1054 = vunpack.c.l.b16 %v1018
        %v1055 = vunpack.c.l.b16 %v1019
        %v1056 = vunpack.c.l.b16 %v1020
        %v1057 = vunpack.c.l.b16 %v1021
        %v1058 = vunpack.c.l.b16 %v1022
        %v1059 = vunpack.c.l.b16 %v1023
        %v1060 = vunpack.c.l.b16 %v1024
        %v1061 = vunpack.c.l.b16 %v1025
        %v1062 = vunpack.c.l.b16 %v1026
        %v1063 = vunpack.c.l.b16 %v1027
        %v1064 = vunpack.c.l.b16 %v1028
        %v1065 = vpack.c.b16 %v1050, %v1049
        %v1066 = vpack.c.b16 %v1052, %v1051
        %v1067 = vpack.c.b16 %v1054, %v1053
        %v1068 = vpack.c.b16 %v1056, %v1055
        %v1069 = vpack.c.b16 %v1058, %v1057
        %v1070 = vpack.c.b16 %v1060, %v1059
        %v1071 = vpack.c.b16 %v1062, %v1061
        %v1072 = vpack.c.b16 %v1064, %v1063
        %1081 = vmatpush.bf16.msra.mxu0 %v1072
        %1082 = vmatpush.bf16.msra.mxu0 %v1071
        %1083 = vmatpush.bf16.msra.mxu0 %v1070
        %1084 = vmatpush.bf16.msra.mxu0 %v1069
        %1085 = vmatpush.bf16.msra.mxu0 %v1068
        %1086 = vmatpush.bf16.msra.mxu0 %v1067
        %1087 = vmatpush.bf16.msra.mxu0 %v1066
        %1088 = vmatpush.bf16.msra.mxu0 %v1065
        %1089 = vmatmul.bf16.gmra.mxu0 %v1009
        %v1090 = vpop.f32.mrf.mxu0
        %v1091 = vadd.f32 %v1031, %v1090
        %v1092 = vpop.f32.mrf.mxu0
        %v1093 = vadd.f32 %v1031, %v1092
        %1094 = vmatmul.bf16.gmra.mxu0 %v1010
        %v1095 = vpop.f32.mrf.mxu0
        %v1096 = vadd.f32 %v1031, %v1095
        %v1097 = vpop.f32.mrf.mxu0
        %v1098 = vadd.f32 %v1031, %v1097
        %1099 = vmatmul.bf16.gmra.mxu0 %v1011
        %v1100 = vpop.f32.mrf.mxu0
        %v1101 = vadd.f32 %v1031, %v1100
        %v1102 = vpop.f32.mrf.mxu0
        %v1103 = vadd.f32 %v1031, %v1102
        %1104 = vmatmul.bf16.gmra.mxu0 %v1012
        %v1105 = vpop.f32.mrf.mxu0
        %v1106 = vadd.f32 %v1031, %v1105
        %v1107 = vpop.f32.mrf.mxu0
        %v1108 = vadd.f32 %v1031, %v1107
        %1109 = vdwg.mxu0
        %v1110 = vxor.u32 %v1091, 2147483648
        %v1111 = vxor.u32 %v1093, 2147483648
        %v1112 = vxor.u32 %v1096, 2147483648
        %v1113 = vxor.u32 %v1098, 2147483648
        %v1114 = vxor.u32 %v1101, 2147483648
        %v1115 = vxor.u32 %v1103, 2147483648
        %v1116 = vxor.u32 %v1106, 2147483648
        %v1117 = vxor.u32 %v1108, 2147483648
        %v1118 = vmul.f32 %v1110, 1.442695
        %v1119 = vpow.pop %v1118
        %v1120 = vmul.f32 %v1111, 1.442695
        %v1121 = vpow.pop %v1120
        %v1122 = vmul.f32 %v1112, 1.442695
        %v1123 = vpow.pop %v1122
        %v1124 = vmul.f32 %v1113, 1.442695
        %v1125 = vpow.pop %v1124
        %v1126 = vmul.f32 %v1114, 1.442695
        %v1127 = vpow.pop %v1126
        %v1128 = vmul.f32 %v1115, 1.442695
        %v1129 = vpow.pop %v1128
        %v1130 = vmul.f32 %v1116, 1.442695
        %v1131 = vpow.pop %v1130
        %v1132 = vmul.f32 %v1117, 1.442695
        %v1133 = vpow.pop %v1132
        %v1134 = vadd.f32 %v1119, 1.0
        %v1135 = vadd.f32 %v1121, 1.0
        %v1136 = vadd.f32 %v1123, 1.0
        %v1137 = vadd.f32 %v1125, 1.0
        %v1138 = vadd.f32 %v1127, 1.0
        %v1139 = vadd.f32 %v1129, 1.0
        %v1140 = vadd.f32 %v1131, 1.0
        %v1141 = vadd.f32 %v1133, 1.0
        %v1142 = vrcp.pop %v1134
        %v1143 = vmul.f32 %v1134, %v1142
        %v1144 = vsub.f32 1.0, %v1143
        %v1145 = vmul.f32 %v1142, %v1144
        %v1146 = vadd.f32 %v1142, %v1145
        %vm1147 = vweird.f32 %v1134
        %vm1148 = vweird.f32 %v1142
        %vm1149 = vmor %vm1147, %vm1148
        %v1150 = vsel %vm1149, %v1142, %v1146
        %v1151 = vand.u32 2147483647, %v1134
        %vm1152 = vcmp.eq.f32.partialorder %v1151, 8.507059e+37
        %v1153 = vand.u32 %v1134, 2147483648
        %v1154 = vor.u32 1.1754944e-38, %v1153
        %v1155 = vsel %vm1152, %v1154, %v1150
        %v1156 = vmul.f32 1.0, %v1155
        %v1157 = vrcp.pop %v1135
        %v1158 = vmul.f32 %v1135, %v1157
        %v1159 = vsub.f32 1.0, %v1158
        %v1160 = vmul.f32 %v1157, %v1159
        %v1161 = vadd.f32 %v1157, %v1160
        %vm1162 = vweird.f32 %v1135
        %vm1163 = vweird.f32 %v1157
        %vm1164 = vmor %vm1162, %vm1163
        %v1165 = vsel %vm1164, %v1157, %v1161
        %v1166 = vand.u32 2147483647, %v1135
        %vm1167 = vcmp.eq.f32.partialorder %v1166, 8.507059e+37
        %v1168 = vand.u32 %v1135, 2147483648
        %v1169 = vor.u32 1.1754944e-38, %v1168
        %v1170 = vsel %vm1167, %v1169, %v1165
        %v1171 = vmul.f32 1.0, %v1170
        %v1172 = vrcp.pop %v1136
        %v1173 = vmul.f32 %v1136, %v1172
        %v1174 = vsub.f32 1.0, %v1173
        %v1175 = vmul.f32 %v1172, %v1174
        %v1176 = vadd.f32 %v1172, %v1175
        %vm1177 = vweird.f32 %v1136
        %vm1178 = vweird.f32 %v1172
        %vm1179 = vmor %vm1177, %vm1178
        %v1180 = vsel %vm1179, %v1172, %v1176
        %v1181 = vand.u32 2147483647, %v1136
        %vm1182 = vcmp.eq.f32.partialorder %v1181, 8.507059e+37
        %v1183 = vand.u32 %v1136, 2147483648
        %v1184 = vor.u32 1.1754944e-38, %v1183
        %v1185 = vsel %vm1182, %v1184, %v1180
        %v1186 = vmul.f32 1.0, %v1185
        %v1187 = vrcp.pop %v1137
        %v1188 = vmul.f32 %v1137, %v1187
        %v1189 = vsub.f32 1.0, %v1188
        %v1190 = vmul.f32 %v1187, %v1189
        %v1191 = vadd.f32 %v1187, %v1190
        %vm1192 = vweird.f32 %v1137
        %vm1193 = vweird.f32 %v1187
        %vm1194 = vmor %vm1192, %vm1193
        %v1195 = vsel %vm1194, %v1187, %v1191
        %v1196 = vand.u32 2147483647, %v1137
        %vm1197 = vcmp.eq.f32.partialorder %v1196, 8.507059e+37
        %v1198 = vand.u32 %v1137, 2147483648
        %v1199 = vor.u32 1.1754944e-38, %v1198
        %v1200 = vsel %vm1197, %v1199, %v1195
        %v1201 = vmul.f32 1.0, %v1200
        %v1202 = vrcp.pop %v1138
        %v1203 = vmul.f32 %v1138, %v1202
        %v1204 = vsub.f32 1.0, %v1203
        %v1205 = vmul.f32 %v1202, %v1204
        %v1206 = vadd.f32 %v1202, %v1205
        %vm1207 = vweird.f32 %v1138
        %vm1208 = vweird.f32 %v1202
        %vm1209 = vmor %vm1207, %vm1208
        %v1210 = vsel %vm1209, %v1202, %v1206
        %v1211 = vand.u32 2147483647, %v1138
        %vm1212 = vcmp.eq.f32.partialorder %v1211, 8.507059e+37
        %v1213 = vand.u32 %v1138, 2147483648
        %v1214 = vor.u32 1.1754944e-38, %v1213
        %v1215 = vsel %vm1212, %v1214, %v1210
        %v1216 = vmul.f32 1.0, %v1215
        %v1217 = vrcp.pop %v1139
        %v1218 = vmul.f32 %v1139, %v1217
        %v1219 = vsub.f32 1.0, %v1218
        %v1220 = vmul.f32 %v1217, %v1219
        %v1221 = vadd.f32 %v1217, %v1220
        %vm1222 = vweird.f32 %v1139
        %vm1223 = vweird.f32 %v1217
        %vm1224 = vmor %vm1222, %vm1223
        %v1225 = vsel %vm1224, %v1217, %v1221
        %v1226 = vand.u32 2147483647, %v1139
        %vm1227 = vcmp.eq.f32.partialorder %v1226, 8.507059e+37
        %v1228 = vand.u32 %v1139, 2147483648
        %v1229 = vor.u32 1.1754944e-38, %v1228
        %v1230 = vsel %vm1227, %v1229, %v1225
        %v1231 = vmul.f32 1.0, %v1230
        %v1232 = vrcp.pop %v1140
        %v1233 = vmul.f32 %v1140, %v1232
        %v1234 = vsub.f32 1.0, %v1233
        %v1235 = vmul.f32 %v1232, %v1234
        %v1236 = vadd.f32 %v1232, %v1235
        %vm1237 = vweird.f32 %v1140
        %vm1238 = vweird.f32 %v1232
        %vm1239 = vmor %vm1237, %vm1238
        %v1240 = vsel %vm1239, %v1232, %v1236
        %v1241 = vand.u32 2147483647, %v1140
        %vm1242 = vcmp.eq.f32.partialorder %v1241, 8.507059e+37
        %v1243 = vand.u32 %v1140, 2147483648
        %v1244 = vor.u32 1.1754944e-38, %v1243
        %v1245 = vsel %vm1242, %v1244, %v1240
        %v1246 = vmul.f32 1.0, %v1245
        %v1247 = vrcp.pop %v1141
        %v1248 = vmul.f32 %v1141, %v1247
        %v1249 = vsub.f32 1.0, %v1248
        %v1250 = vmul.f32 %v1247, %v1249
        %v1251 = vadd.f32 %v1247, %v1250
        %vm1252 = vweird.f32 %v1141
        %vm1253 = vweird.f32 %v1247
        %vm1254 = vmor %vm1252, %vm1253
        %v1255 = vsel %vm1254, %v1247, %v1251
        %v1256 = vand.u32 2147483647, %v1141
        %vm1257 = vcmp.eq.f32.partialorder %v1256, 8.507059e+37
        %v1258 = vand.u32 %v1141, 2147483648
        %v1259 = vor.u32 1.1754944e-38, %v1258
        %v1260 = vsel %vm1257, %v1259, %v1255
        %v1261 = vmul.f32 1.0, %v1260
        %1262 = vst [vmem:[%s466] sm:$0xff] %v1156
        %1263 = vst [vmem:[%s466 + $0x8] sm:$0xff] %v1171
        %1264 = vst [vmem:[%s466 + $0x10] sm:$0xff] %v1186
        %1265 = vst [vmem:[%s466 + $0x18] sm:$0xff] %v1201
        %1266 = vst [vmem:[%s466 + $0x20] sm:$0xff] %v1216
        %1267 = vst [vmem:[%s466 + $0x28] sm:$0xff] %v1231
        %1268 = vst [vmem:[%s466 + $0x30] sm:$0xff] %v1246
        %1269 = vst [vmem:[%s466 + $0x38] sm:$0xff] %v1261
        %s1270 = sand.u32 %s315, 1
        %s1271 = scalar_lea.sflag [#allocation4], %s1270
        %s1272 = sand.u32 %s315, 1
        %s1273 = smul.addr %s1272, 64
        %s1274 = scalar_lea.vmem [#allocation7], %s1273
        // Predicated region
        $region81: #{tpu_custom_call.1} parent=71 // pred_check
          %p1275 = pneg %p325
        $region82: #{tpu_custom_call.1} parent=71 // pred_check_branch
          %1277 = sbr.rel (%p1275) target = $region84
        $region83: #{tpu_custom_call.1} parent=71 // pred_region
          %s1278 = smul.u32 8, %s29
          %1280 = vsyncadd %s1271, 0
          %s1281 = smul.addr %s1278, 8
          %s1282 = scalar_lea.hbm %s13, %s1281
          %s1283 = sshll.u32 %s1274, 4
          %s1284 = int_to_ptr.vmem [resolvable:$true] %s1283
          %s1285 = sshll.u32 %s1282, 4
          %s1286 = int_to_ptr.hbm [resolvable:$true] %s1285
          %1291 = dma.vmem_to_hbm [thread:$0]  %s1284, 1024, %s1286, %s1271, 128, 128, 8
        $region84: #{tpu_custom_call.1} parent=71 // pred_fallthru
          _
      $region72: #{tpu_custom_call.1} parent=5 // pred_fallthru
        _
      %p1292 = scmp.le.s32.totalorder 2, %s24
      // Predicated region
      $region85: #{tpu_custom_call.1} parent=5 // pred_check
        %p1293 = pneg %p1292
      $region86: #{tpu_custom_call.1} parent=5 // pred_check_branch
        %1295 = sbr.rel (%p1293) target = $region88
      $region87: #{tpu_custom_call.1} parent=5 // pred_region
        %s1296 = ssub.s32 %s24, 2
        // Predicated region
        $region89: #{tpu_custom_call.1} parent=87 // pred_check
          %p1297 = pneg %p331
        $region90: #{tpu_custom_call.1} parent=87 // pred_check_branch
          %1299 = sbr.rel (%p1297) target = $region92
        $region91: #{tpu_custom_call.1} parent=87 // pred_region
          %s1300 = sand.u32 %s316, 1
          %s1301 = scalar_lea.sflag [#allocation4], %s1300
          %s1302 = sand.u32 %s316, 1
          %s1303 = smul.addr %s1302, 64
          %s1304 = scalar_lea.vmem [#allocation7], %s1303
          %1306 = dma.done %s1301, 1024
        $region92: #{tpu_custom_call.1} parent=87 // pred_fallthru
          _
      $region88: #{tpu_custom_call.1} parent=5 // pred_fallthru
        _
    $region6: #{tpu_custom_call.1} parent=1 // loop_footer
      %s28 = sadd.s32 1, %s24
    $region7: #{tpu_custom_call.1} parent=1 // loop_footer_branch
      %23 = sbr.rel target = $region3
    $region8: #{tpu_custom_call.1} parent=1 // loop_exit
      _
    %1307 = vsyncpa [#allocation3], 1
    %s1308 = scalar_lea.sflag [#allocation3], 1
    %1309 = vsyncpa %s1308, 1
    %1310 = vsyncpa [#allocation6], 1
    %1311 = vsyncpa [#allocation4], 1
    %s1312 = scalar_lea.sflag [#allocation4], 1
    %1313 = vsyncpa %s1312, 1

</llo_original>
